<compile_context>
chip_gen: v6e
topology: v6e:2x2x1
jax: 0.10.0
libtpu: 0.0.40
codegen_flags: <defaults>
</compile_context>

<pallas_src>
import jax
import jax.numpy as jnp
from jax.experimental import pallas as pl
from jax.experimental.pallas import tpu as pltpu

INPUT_SIZE = 2
HIDDEN_SIZE = 3
OUTPUT_SIZE = 2
NUM_LAYERS = 5

# Row layout of the packed per-layer parameter slab (lane dim padded to _SLAB_COLS).
_ROW_WIH = 0                              # rows 0:2 , cols 0:3 -> W_ih (in,  hidden)
_ROW_WHH = _ROW_WIH + INPUT_SIZE          # rows 2:5 , cols 0:3 -> W_hh (hid, hidden)
_ROW_WHO = _ROW_WHH + HIDDEN_SIZE         # rows 5:8 , cols 0:2 -> W_ho (hid, out)
_ROW_BH = _ROW_WHO + HIDDEN_SIZE          # row  8   , cols 0:3 -> b_ih + b_hh
_ROW_BO = _ROW_BH + 1                     # row  9   , cols 0:2 -> b_ho
_SLAB_ROWS = _ROW_BO + 1                  # 10
_SLAB_COLS = 4


def _make_ffn_kernel(batch, seq_len):
    """Fused relu->r1->relu->...->relu->r5 kernel. Activations are time-major 2D (T*B, F)."""

    def kernel(x_ref, w_ref, y_ref, pre_buf, h_buf):
        # x_ref: (T*B, IN)  w_ref: (L, 10, 4)  y_ref: (T*B, OUT)
        # pre_buf / h_buf: (T*B, HIDDEN) f32 VMEM scratch, reused by every layer.
        act = x_ref[...].astype(jnp.float32)                                  # (T*B, in)

        for l in range(NUM_LAYERS):                                           # static unroll
            wih = w_ref[l, _ROW_WIH:_ROW_WIH + INPUT_SIZE, 0:HIDDEN_SIZE]     # (2, 3)
            who = w_ref[l, _ROW_WHO:_ROW_WHO + HIDDEN_SIZE, 0:OUTPUT_SIZE]    # (3, 2)
            bh = w_ref[l, _ROW_BH:_ROW_BH + 1, 0:HIDDEN_SIZE]                 # (1, 3) = b_ih+b_hh
            bo = w_ref[l, _ROW_BO:_ROW_BO + 1, 0:OUTPUT_SIZE]                 # (1, 2)

            # ReLU preceding this recurrent layer (fused).
            a = jnp.maximum(act, 0.0)

            # Hoisted input projection for ALL timesteps: one MXU dot (bf16 in, f32 acc),
            # one bias broadcast, one dense VMEM store.
            pre = jnp.dot(a.astype(jnp.bfloat16), wih.astype(jnp.bfloat16),
                          preferred_element_type=jnp.float32) + bh            # (T*B, hidden)
            pre_buf[...] = pre

            # Pre-broadcast the W_hh rows once per layer; the serial recurrence then runs
            # purely on VPU (3 broadcast-mul-adds) + EUP tanh per step.
            whh_rows = [
                jnp.broadcast_to(
                    w_ref[l, _ROW_WHH + k:_ROW_WHH + k + 1, 0:HIDDEN_SIZE],
                    (batch, HIDDEN_SIZE))
                for k in range(HIDDEN_SIZE)
            ]

            h = jnp.zeros((batch, HIDDEN_SIZE), jnp.float32)
            for t in range(seq_len):                                          # static unroll (T=8)
                hw = pre_buf[t * batch:(t + 1) * batch, :]                    # (B, hidden)
                for k in range(HIDDEN_SIZE):
                    hw = hw + h[:, k:k + 1] * whh_rows[k]                     # VPU mul-add
                h = jnp.tanh(hw)                                              # EUP
                h_buf[t * batch:(t + 1) * batch, :] = h

            # Hoisted output projection: one MXU dot + single bias add.
            act = jnp.dot(h_buf[...].astype(jnp.bfloat16), who.astype(jnp.bfloat16),
                          preferred_element_type=jnp.float32) + bo            # (T*B, out)

        y_ref[...] = act.astype(y_ref.dtype)                                  # single dense store

    return kernel


def pack_params(all_params):
    """Pack 5 layers' (W_ih, W_hh, b_ih, b_hh, W_ho, b_ho) into one f32 slab (one DMA)."""
    slab = jnp.zeros((NUM_LAYERS, _SLAB_ROWS, _SLAB_COLS), jnp.float32)
    for l, (wih, whh, bih, bhh, who, bho) in enumerate(all_params):
        slab = slab.at[l, _ROW_WIH:_ROW_WIH + INPUT_SIZE, 0:HIDDEN_SIZE].set(wih)
        slab = slab.at[l, _ROW_WHH:_ROW_WHH + HIDDEN_SIZE, 0:HIDDEN_SIZE].set(whh)
        slab = slab.at[l, _ROW_WHO:_ROW_WHO + HIDDEN_SIZE, 0:OUTPUT_SIZE].set(who)
        slab = slab.at[l, _ROW_BH, 0:HIDDEN_SIZE].set((bih + bhh).reshape(HIDDEN_SIZE))
        slab = slab.at[l, _ROW_BO, 0:OUTPUT_SIZE].set(bho.reshape(OUTPUT_SIZE))
    return slab


def decoder_feedforward_network(x, w_slab):
    """relu->r1->relu->r2->relu->r3->relu->r4->relu->r5, fully fused in one kernel.

    x: (B, T, INPUT_SIZE) batch-first (PyTorch convention) -> (B, T, OUTPUT_SIZE).
    """
    B, T, F = x.shape
    assert F == INPUT_SIZE
    # Single layout change at network entry: batch-major -> time-major, flattened to 2D.
    x_tb = jnp.transpose(x, (1, 0, 2)).reshape(T * B, INPUT_SIZE).astype(jnp.float32)
    vmem = pl.BlockSpec(memory_space=pltpu.MemorySpace.VMEM)
    y_tb = pl.pallas_call(
        _make_ffn_kernel(B, T),
        out_shape=jax.ShapeDtypeStruct((T * B, OUTPUT_SIZE), jnp.float32),
        in_specs=[vmem, vmem],
        out_specs=vmem,
        scratch_shapes=[pltpu.VMEM((T * B, HIDDEN_SIZE), jnp.float32),
                        pltpu.VMEM((T * B, HIDDEN_SIZE), jnp.float32)],
    )(x_tb, w_slab)
    # Single layout change at network exit: time-major -> batch-major.
    return jnp.transpose(y_tb.reshape(T, B, OUTPUT_SIZE), (1, 0, 2))


def init_layer_params(key):
    """PyTorch-style uniform(-1/sqrt(hidden), 1/sqrt(hidden)) init, deterministic."""
    keys = jax.random.split(key, 6)
    s = 1.0 / float(HIDDEN_SIZE) ** 0.5

    def u(k, shape):
        return jax.random.uniform(k, shape, minval=-s, maxval=s, dtype=jnp.float32)

    wih = u(keys[0], (INPUT_SIZE, HIDDEN_SIZE))
    whh = u(keys[1], (HIDDEN_SIZE, HIDDEN_SIZE))
    bih = u(keys[2], (1, HIDDEN_SIZE))
    bhh = u(keys[3], (1, HIDDEN_SIZE))
    who = u(keys[4], (HIDDEN_SIZE, OUTPUT_SIZE))
    bho = u(keys[5], (1, OUTPUT_SIZE))
    return (wih, whh, bih, bhh, who, bho)


def init_network_params(key):
    return tuple(init_layer_params(k) for k in jax.random.split(key, NUM_LAYERS))


def _reference(x, all_params):
    """Pure-JAX reference mirroring the kernel math (bf16 MXU projections, f32 elsewhere)."""
    B, T, _ = x.shape
    act = jnp.transpose(x, (1, 0, 2)).reshape(T * B, INPUT_SIZE).astype(jnp.float32)
    for (wih, whh, bih, bhh, who, bho) in all_params:
        a = jnp.maximum(act, 0.0)
        pre = jnp.dot(a.astype(jnp.bfloat16), wih.astype(jnp.bfloat16),
                      preferred_element_type=jnp.float32) + (bih + bhh)
        h = jnp.zeros((B, HIDDEN_SIZE), jnp.float32)
        hs = []
        for t in range(T):
            hw = pre[t * B:(t + 1) * B, :]
            for k in range(HIDDEN_SIZE):
                hw = hw + h[:, k:k + 1] * whh[k:k + 1, :]
            h = jnp.tanh(hw)
            hs.append(h)
        hseq = jnp.concatenate(hs, axis=0)
        act = jnp.dot(hseq.astype(jnp.bfloat16), who.astype(jnp.bfloat16),
                      preferred_element_type=jnp.float32) + bho
    return jnp.transpose(act.reshape(T, B, OUTPUT_SIZE), (1, 0, 2))


if __name__ == "__main__":
    key = jax.random.PRNGKey(0)
    k_x, k_p = jax.random.split(key)

    B, T = 2, 8                                    # batch=2, seq=8, feature=2
    x = jax.random.normal(k_x, (B, T, INPUT_SIZE), dtype=jnp.float32)
    params = init_network_params(k_p)
    w_slab = pack_params(params)

    y = jax.jit(decoder_feedforward_network)(x, w_slab)
    jax.block_until_ready(y)
    assert y.shape == (B, T, OUTPUT_SIZE) and y.dtype == jnp.float32

    y_ref = jax.jit(_reference)(x, params)
    jax.block_until_ready(y_ref)
    assert bool(jnp.allclose(y, y_ref, atol=5e-3, rtol=5e-3)), (
        "kernel/reference mismatch, max abs err = "
        f"{float(jnp.max(jnp.abs(y - y_ref)))}")

    print("KERNEL_OK")
</pallas_src>

<mosaic_0001>
module attributes {stable_mosaic.version = 11 : i64} {
  func.func @kernel(%arg0: memref<16x2xf32, #tpu.memory_space<vmem>>, %arg1: memref<5x10x4xf32, #tpu.memory_space<vmem>>, %arg2: memref<16x2xf32, #tpu.memory_space<vmem>>, %arg3: memref<16x3xf32, #tpu.memory_space<vmem>>, %arg4: memref<16x3xf32, #tpu.memory_space<vmem>>) attributes {dimension_semantics = [], scalar_prefetch = 0 : i64, scratch_operands = 2 : i64, tpu.core_type = #tpu.core_type<tc>} {
    %c0 = arith.constant 0 : index
    %c0_0 = arith.constant 0 : index
    %0 = vector.load %arg0[%c0, %c0_0] : memref<16x2xf32, #tpu.memory_space<vmem>>, vector<16x2xf32>
    %c0_1 = arith.constant 0 : index
    %c0_2 = arith.constant 0 : index
    %c0_3 = arith.constant 0 : index
    %1 = vector.load %arg1[%c0_1, %c0_2, %c0_3] : memref<5x10x4xf32, #tpu.memory_space<vmem>>, vector<1x2x3xf32>
    %2 = vector.shape_cast %1 : vector<1x2x3xf32> to vector<2x3xf32>
    %c0_4 = arith.constant 0 : index
    %c5 = arith.constant 5 : index
    %c0_5 = arith.constant 0 : index
    %3 = vector.load %arg1[%c0_4, %c5, %c0_5] : memref<5x10x4xf32, #tpu.memory_space<vmem>>, vector<1x3x2xf32>
    %4 = vector.shape_cast %3 : vector<1x3x2xf32> to vector<3x2xf32>
    %c0_6 = arith.constant 0 : index
    %c8 = arith.constant 8 : index
    %c0_7 = arith.constant 0 : index
    %5 = vector.load %arg1[%c0_6, %c8, %c0_7] : memref<5x10x4xf32, #tpu.memory_space<vmem>>, vector<1x1x3xf32>
    %6 = vector.shape_cast %5 : vector<1x1x3xf32> to vector<1x3xf32>
    %c0_8 = arith.constant 0 : index
    %c9 = arith.constant 9 : index
    %c0_9 = arith.constant 0 : index
    %7 = vector.load %arg1[%c0_8, %c9, %c0_9] : memref<5x10x4xf32, #tpu.memory_space<vmem>>, vector<1x1x2xf32>
    %8 = vector.shape_cast %7 : vector<1x1x2xf32> to vector<1x2xf32>
    %cst = arith.constant 0.000000e+00 : f32
    %9 = vector.broadcast %cst : f32 to vector<16x2xf32>
    %10 = arith.maximumf %0, %9 : vector<16x2xf32>
    %11 = arith.truncf %10 : vector<16x2xf32> to vector<16x2xbf16>
    %12 = arith.truncf %2 : vector<2x3xf32> to vector<2x3xbf16>
    %cst_10 = arith.constant dense<0.000000e+00> : vector<16x3xf32>
    %13 = tpu.matmul %11, %12, %cst_10 {dimension_numbers = #tpu.dot_dimension_numbers<[1], [0], [0], [1], [0, 0, 1, 1], [], []>} : vector<16x2xbf16>, vector<2x3xbf16>, vector<16x3xf32> -> vector<16x3xf32>
    %14 = vector.broadcast %6 : vector<1x3xf32> to vector<16x3xf32>
    %15 = arith.addf %13, %14 : vector<16x3xf32>
    %c0_11 = arith.constant 0 : index
    %c0_12 = arith.constant 0 : index
    %16 = vector.load %arg3[%c0_11, %c0_12] : memref<16x3xf32, #tpu.memory_space<vmem>>, vector<16x3xf32>
    tpu.vector_store %arg3[%c0_11, %c0_12], %15 {strides = array<i32>} : memref<16x3xf32, #tpu.memory_space<vmem>>, vector<16x3xf32>,
    %c0_13 = arith.constant 0 : index
    %c2 = arith.constant 2 : index
    %c0_14 = arith.constant 0 : index
    %17 = vector.load %arg1[%c0_13, %c2, %c0_14] : memref<5x10x4xf32, #tpu.memory_space<vmem>>, vector<1x1x3xf32>
    %18 = vector.shape_cast %17 : vector<1x1x3xf32> to vector<1x3xf32>
    %19 = vector.shape_cast %18 : vector<1x3xf32> to vector<1x3xf32>
    %20 = vector.broadcast %19 : vector<1x3xf32> to vector<2x3xf32>
    %c0_15 = arith.constant 0 : index
    %c3 = arith.constant 3 : index
    %c0_16 = arith.constant 0 : index
    %21 = vector.load %arg1[%c0_15, %c3, %c0_16] : memref<5x10x4xf32, #tpu.memory_space<vmem>>, vector<1x1x3xf32>
    %22 = vector.shape_cast %21 : vector<1x1x3xf32> to vector<1x3xf32>
    %23 = vector.shape_cast %22 : vector<1x3xf32> to vector<1x3xf32>
    %24 = vector.broadcast %23 : vector<1x3xf32> to vector<2x3xf32>
    %c0_17 = arith.constant 0 : index
    %c4 = arith.constant 4 : index
    %c0_18 = arith.constant 0 : index
    %25 = vector.load %arg1[%c0_17, %c4, %c0_18] : memref<5x10x4xf32, #tpu.memory_space<vmem>>, vector<1x1x3xf32>
    %26 = vector.shape_cast %25 : vector<1x1x3xf32> to vector<1x3xf32>
    %27 = vector.shape_cast %26 : vector<1x3xf32> to vector<1x3xf32>
    %28 = vector.broadcast %27 : vector<1x3xf32> to vector<2x3xf32>
    %cst_19 = arith.constant 0.000000e+00 : f32
    %29 = vector.broadcast %cst_19 : f32 to vector<2x3xf32>
    %c0_20 = arith.constant 0 : index
    %c0_21 = arith.constant 0 : index
    %30 = vector.load %arg3[%c0_20, %c0_21] : memref<16x3xf32, #tpu.memory_space<vmem>>, vector<2x3xf32>
    %31 = vector.extract_strided_slice %29 {offsets = [0, 0], sizes = [2, 1], strides = [1, 1]} : vector<2x3xf32> to vector<2x1xf32>
    %32 = vector.broadcast %31 : vector<2x1xf32> to vector<2x3xf32>
    %33 = arith.mulf %32, %20 : vector<2x3xf32>
    %34 = arith.addf %30, %33 : vector<2x3xf32>
    %35 = vector.extract_strided_slice %29 {offsets = [0, 1], sizes = [2, 1], strides = [1, 1]} : vector<2x3xf32> to vector<2x1xf32>
    %36 = vector.broadcast %35 : vector<2x1xf32> to vector<2x3xf32>
    %37 = arith.mulf %36, %24 : vector<2x3xf32>
    %38 = arith.addf %34, %37 : vector<2x3xf32>
    %39 = vector.extract_strided_slice %29 {offsets = [0, 2], sizes = [2, 1], strides = [1, 1]} : vector<2x3xf32> to vector<2x1xf32>
    %40 = vector.broadcast %39 : vector<2x1xf32> to vector<2x3xf32>
    %41 = arith.mulf %40, %28 : vector<2x3xf32>
    %42 = arith.addf %38, %41 : vector<2x3xf32>
    %43 = math.tanh %42 : vector<2x3xf32>
    %c0_22 = arith.constant 0 : index
    %c0_23 = arith.constant 0 : index
    %44 = vector.load %arg4[%c0_22, %c0_23] : memref<16x3xf32, #tpu.memory_space<vmem>>, vector<2x3xf32>
    tpu.vector_store %arg4[%c0_22, %c0_23], %43 {strides = array<i32>} : memref<16x3xf32, #tpu.memory_space<vmem>>, vector<2x3xf32>,
    %c2_24 = arith.constant 2 : index
    %c0_25 = arith.constant 0 : index
    %45 = vector.load %arg3[%c2_24, %c0_25] : memref<16x3xf32, #tpu.memory_space<vmem>>, vector<2x3xf32>
    %46 = vector.extract_strided_slice %43 {offsets = [0, 0], sizes = [2, 1], strides = [1, 1]} : vector<2x3xf32> to vector<2x1xf32>
    %47 = vector.broadcast %46 : vector<2x1xf32> to vector<2x3xf32>
    %48 = arith.mulf %47, %20 : vector<2x3xf32>
    %49 = arith.addf %45, %48 : vector<2x3xf32>
    %50 = vector.extract_strided_slice %43 {offsets = [0, 1], sizes = [2, 1], strides = [1, 1]} : vector<2x3xf32> to vector<2x1xf32>
    %51 = vector.broadcast %50 : vector<2x1xf32> to vector<2x3xf32>
    %52 = arith.mulf %51, %24 : vector<2x3xf32>
    %53 = arith.addf %49, %52 : vector<2x3xf32>
    %54 = vector.extract_strided_slice %43 {offsets = [0, 2], sizes = [2, 1], strides = [1, 1]} : vector<2x3xf32> to vector<2x1xf32>
    %55 = vector.broadcast %54 : vector<2x1xf32> to vector<2x3xf32>
    %56 = arith.mulf %55, %28 : vector<2x3xf32>
    %57 = arith.addf %53, %56 : vector<2x3xf32>
    %58 = math.tanh %57 : vector<2x3xf32>
    %c2_26 = arith.constant 2 : index
    %c0_27 = arith.constant 0 : index
    %59 = vector.load %arg4[%c2_26, %c0_27] : memref<16x3xf32, #tpu.memory_space<vmem>>, vector<2x3xf32>
    tpu.vector_store %arg4[%c2_26, %c0_27], %58 {strides = array<i32>} : memref<16x3xf32, #tpu.memory_space<vmem>>, vector<2x3xf32>,
    %c4_28 = arith.constant 4 : index
    %c0_29 = arith.constant 0 : index
    %60 = vector.load %arg3[%c4_28, %c0_29] : memref<16x3xf32, #tpu.memory_space<vmem>>, vector<2x3xf32>
    %61 = vector.extract_strided_slice %58 {offsets = [0, 0], sizes = [2, 1], strides = [1, 1]} : vector<2x3xf32> to vector<2x1xf32>
    %62 = vector.broadcast %61 : vector<2x1xf32> to vector<2x3xf32>
    %63 = arith.mulf %62, %20 : vector<2x3xf32>
    %64 = arith.addf %60, %63 : vector<2x3xf32>
    %65 = vector.extract_strided_slice %58 {offsets = [0, 1], sizes = [2, 1], strides = [1, 1]} : vector<2x3xf32> to vector<2x1xf32>
    %66 = vector.broadcast %65 : vector<2x1xf32> to vector<2x3xf32>
    %67 = arith.mulf %66, %24 : vector<2x3xf32>
    %68 = arith.addf %64, %67 : vector<2x3xf32>
    %69 = vector.extract_strided_slice %58 {offsets = [0, 2], sizes = [2, 1], strides = [1, 1]} : vector<2x3xf32> to vector<2x1xf32>
    %70 = vector.broadcast %69 : vector<2x1xf32> to vector<2x3xf32>
    %71 = arith.mulf %70, %28 : vector<2x3xf32>
    %72 = arith.addf %68, %71 : vector<2x3xf32>
    %73 = math.tanh %72 : vector<2x3xf32>
    %c4_30 = arith.constant 4 : index
    %c0_31 = arith.constant 0 : index
    %74 = vector.load %arg4[%c4_30, %c0_31] : memref<16x3xf32, #tpu.memory_space<vmem>>, vector<2x3xf32>
    tpu.vector_store %arg4[%c4_30, %c0_31], %73 {strides = array<i32>} : memref<16x3xf32, #tpu.memory_space<vmem>>, vector<2x3xf32>,
    %c6 = arith.constant 6 : index
    %c0_32 = arith.constant 0 : index
    %75 = vector.load %arg3[%c6, %c0_32] : memref<16x3xf32, #tpu.memory_space<vmem>>, vector<2x3xf32>
    %76 = vector.extract_strided_slice %73 {offsets = [0, 0], sizes = [2, 1], strides = [1, 1]} : vector<2x3xf32> to vector<2x1xf32>
    %77 = vector.broadcast %76 : vector<2x1xf32> to vector<2x3xf32>
    %78 = arith.mulf %77, %20 : vector<2x3xf32>
    %79 = arith.addf %75, %78 : vector<2x3xf32>
    %80 = vector.extract_strided_slice %73 {offsets = [0, 1], sizes = [2, 1], strides = [1, 1]} : vector<2x3xf32> to vector<2x1xf32>
    %81 = vector.broadcast %80 : vector<2x1xf32> to vector<2x3xf32>
    %82 = arith.mulf %81, %24 : vector<2x3xf32>
    %83 = arith.addf %79, %82 : vector<2x3xf32>
    %84 = vector.extract_strided_slice %73 {offsets = [0, 2], sizes = [2, 1], strides = [1, 1]} : vector<2x3xf32> to vector<2x1xf32>
    %85 = vector.broadcast %84 : vector<2x1xf32> to vector<2x3xf32>
    %86 = arith.mulf %85, %28 : vector<2x3xf32>
    %87 = arith.addf %83, %86 : vector<2x3xf32>
    %88 = math.tanh %87 : vector<2x3xf32>
    %c6_33 = arith.constant 6 : index
    %c0_34 = arith.constant 0 : index
    %89 = vector.load %arg4[%c6_33, %c0_34] : memref<16x3xf32, #tpu.memory_space<vmem>>, vector<2x3xf32>
    tpu.vector_store %arg4[%c6_33, %c0_34], %88 {strides = array<i32>} : memref<16x3xf32, #tpu.memory_space<vmem>>, vector<2x3xf32>,
    %c8_35 = arith.constant 8 : index
    %c0_36 = arith.constant 0 : index
    %90 = vector.load %arg3[%c8_35, %c0_36] : memref<16x3xf32, #tpu.memory_space<vmem>>, vector<2x3xf32>
    %91 = vector.extract_strided_slice %88 {offsets = [0, 0], sizes = [2, 1], strides = [1, 1]} : vector<2x3xf32> to vector<2x1xf32>
    %92 = vector.broadcast %91 : vector<2x1xf32> to vector<2x3xf32>
    %93 = arith.mulf %92, %20 : vector<2x3xf32>
    %94 = arith.addf %90, %93 : vector<2x3xf32>
    %95 = vector.extract_strided_slice %88 {offsets = [0, 1], sizes = [2, 1], strides = [1, 1]} : vector<2x3xf32> to vector<2x1xf32>
    %96 = vector.broadcast %95 : vector<2x1xf32> to vector<2x3xf32>
    %97 = arith.mulf %96, %24 : vector<2x3xf32>
    %98 = arith.addf %94, %97 : vector<2x3xf32>
    %99 = vector.extract_strided_slice %88 {offsets = [0, 2], sizes = [2, 1], strides = [1, 1]} : vector<2x3xf32> to vector<2x1xf32>
    %100 = vector.broadcast %99 : vector<2x1xf32> to vector<2x3xf32>
    %101 = arith.mulf %100, %28 : vector<2x3xf32>
    %102 = arith.addf %98, %101 : vector<2x3xf32>
    %103 = math.tanh %102 : vector<2x3xf32>
    %c8_37 = arith.constant 8 : index
    %c0_38 = arith.constant 0 : index
    %104 = vector.load %arg4[%c8_37, %c0_38] : memref<16x3xf32, #tpu.memory_space<vmem>>, vector<2x3xf32>
    tpu.vector_store %arg4[%c8_37, %c0_38], %103 {strides = array<i32>} : memref<16x3xf32, #tpu.memory_space<vmem>>, vector<2x3xf32>,
    %c10 = arith.constant 10 : index
    %c0_39 = arith.constant 0 : index
    %105 = vector.load %arg3[%c10, %c0_39] : memref<16x3xf32, #tpu.memory_space<vmem>>, vector<2x3xf32>
    %106 = vector.extract_strided_slice %103 {offsets = [0, 0], sizes = [2, 1], strides = [1, 1]} : vector<2x3xf32> to vector<2x1xf32>
    %107 = vector.broadcast %106 : vector<2x1xf32> to vector<2x3xf32>
    %108 = arith.mulf %107, %20 : vector<2x3xf32>
    %109 = arith.addf %105, %108 : vector<2x3xf32>
    %110 = vector.extract_strided_slice %103 {offsets = [0, 1], sizes = [2, 1], strides = [1, 1]} : vector<2x3xf32> to vector<2x1xf32>
    %111 = vector.broadcast %110 : vector<2x1xf32> to vector<2x3xf32>
    %112 = arith.mulf %111, %24 : vector<2x3xf32>
    %113 = arith.addf %109, %112 : vector<2x3xf32>
    %114 = vector.extract_strided_slice %103 {offsets = [0, 2], sizes = [2, 1], strides = [1, 1]} : vector<2x3xf32> to vector<2x1xf32>
    %115 = vector.broadcast %114 : vector<2x1xf32> to vector<2x3xf32>
    %116 = arith.mulf %115, %28 : vector<2x3xf32>
    %117 = arith.addf %113, %116 : vector<2x3xf32>
    %118 = math.tanh %117 : vector<2x3xf32>
    %c10_40 = arith.constant 10 : index
    %c0_41 = arith.constant 0 : index
    %119 = vector.load %arg4[%c10_40, %c0_41] : memref<16x3xf32, #tpu.memory_space<vmem>>, vector<2x3xf32>
    tpu.vector_store %arg4[%c10_40, %c0_41], %118 {strides = array<i32>} : memref<16x3xf32, #tpu.memory_space<vmem>>, vector<2x3xf32>,
    %c12 = arith.constant 12 : index
    %c0_42 = arith.constant 0 : index
    %120 = vector.load %arg3[%c12, %c0_42] : memref<16x3xf32, #tpu.memory_space<vmem>>, vector<2x3xf32>
    %121 = vector.extract_strided_slice %118 {offsets = [0, 0], sizes = [2, 1], strides = [1, 1]} : vector<2x3xf32> to vector<2x1xf32>
    %122 = vector.broadcast %121 : vector<2x1xf32> to vector<2x3xf32>
    %123 = arith.mulf %122, %20 : vector<2x3xf32>
    %124 = arith.addf %120, %123 : vector<2x3xf32>
    %125 = vector.extract_strided_slice %118 {offsets = [0, 1], sizes = [2, 1], strides = [1, 1]} : vector<2x3xf32> to vector<2x1xf32>
    %126 = vector.broadcast %125 : vector<2x1xf32> to vector<2x3xf32>
    %127 = arith.mulf %126, %24 : vector<2x3xf32>
    %128 = arith.addf %124, %127 : vector<2x3xf32>
    %129 = vector.extract_strided_slice %118 {offsets = [0, 2], sizes = [2, 1], strides = [1, 1]} : vector<2x3xf32> to vector<2x1xf32>
    %130 = vector.broadcast %129 : vector<2x1xf32> to vector<2x3xf32>
    %131 = arith.mulf %130, %28 : vector<2x3xf32>
    %132 = arith.addf %128, %131 : vector<2x3xf32>
    %133 = math.tanh %132 : vector<2x3xf32>
    %c12_43 = arith.constant 12 : index
    %c0_44 = arith.constant 0 : index
    %134 = vector.load %arg4[%c12_43, %c0_44] : memref<16x3xf32, #tpu.memory_space<vmem>>, vector<2x3xf32>
    tpu.vector_store %arg4[%c12_43, %c0_44], %133 {strides = array<i32>} : memref<16x3xf32, #tpu.memory_space<vmem>>, vector<2x3xf32>,
    %c14 = arith.constant 14 : index
    %c0_45 = arith.constant 0 : index
    %135 = vector.load %arg3[%c14, %c0_45] : memref<16x3xf32, #tpu.memory_space<vmem>>, vector<2x3xf32>
    %136 = vector.extract_strided_slice %133 {offsets = [0, 0], sizes = [2, 1], strides = [1, 1]} : vector<2x3xf32> to vector<2x1xf32>
    %137 = vector.broadcast %136 : vector<2x1xf32> to vector<2x3xf32>
    %138 = arith.mulf %137, %20 : vector<2x3xf32>
    %139 = arith.addf %135, %138 : vector<2x3xf32>
    %140 = vector.extract_strided_slice %133 {offsets = [0, 1], sizes = [2, 1], strides = [1, 1]} : vector<2x3xf32> to vector<2x1xf32>
    %141 = vector.broadcast %140 : vector<2x1xf32> to vector<2x3xf32>
    %142 = arith.mulf %141, %24 : vector<2x3xf32>
    %143 = arith.addf %139, %142 : vector<2x3xf32>
    %144 = vector.extract_strided_slice %133 {offsets = [0, 2], sizes = [2, 1], strides = [1, 1]} : vector<2x3xf32> to vector<2x1xf32>
    %145 = vector.broadcast %144 : vector<2x1xf32> to vector<2x3xf32>
    %146 = arith.mulf %145, %28 : vector<2x3xf32>
    %147 = arith.addf %143, %146 : vector<2x3xf32>
    %148 = math.tanh %147 : vector<2x3xf32>
    %c14_46 = arith.constant 14 : index
    %c0_47 = arith.constant 0 : index
    %149 = vector.load %arg4[%c14_46, %c0_47] : memref<16x3xf32, #tpu.memory_space<vmem>>, vector<2x3xf32>
    tpu.vector_store %arg4[%c14_46, %c0_47], %148 {strides = array<i32>} : memref<16x3xf32, #tpu.memory_space<vmem>>, vector<2x3xf32>,
    %c0_48 = arith.constant 0 : index
    %c0_49 = arith.constant 0 : index
    %150 = vector.load %arg4[%c0_48, %c0_49] : memref<16x3xf32, #tpu.memory_space<vmem>>, vector<16x3xf32>
    %151 = arith.truncf %150 : vector<16x3xf32> to vector<16x3xbf16>
    %152 = arith.truncf %4 : vector<3x2xf32> to vector<3x2xbf16>
    %cst_50 = arith.constant dense<0.000000e+00> : vector<16x2xf32>
    %153 = tpu.matmul %151, %152, %cst_50 {dimension_numbers = #tpu.dot_dimension_numbers<[1], [0], [0], [1], [0, 0, 1, 1], [], []>} : vector<16x3xbf16>, vector<3x2xbf16>, vector<16x2xf32> -> vector<16x2xf32>
    %154 = vector.broadcast %8 : vector<1x2xf32> to vector<16x2xf32>
    %155 = arith.addf %153, %154 : vector<16x2xf32>
    %c1 = arith.constant 1 : index
    %c0_51 = arith.constant 0 : index
    %c0_52 = arith.constant 0 : index
    %156 = vector.load %arg1[%c1, %c0_51, %c0_52] : memref<5x10x4xf32, #tpu.memory_space<vmem>>, vector<1x2x3xf32>
    %157 = vector.shape_cast %156 : vector<1x2x3xf32> to vector<2x3xf32>
    %c1_53 = arith.constant 1 : index
    %c5_54 = arith.constant 5 : index
    %c0_55 = arith.constant 0 : index
    %158 = vector.load %arg1[%c1_53, %c5_54, %c0_55] : memref<5x10x4xf32, #tpu.memory_space<vmem>>, vector<1x3x2xf32>
    %159 = vector.shape_cast %158 : vector<1x3x2xf32> to vector<3x2xf32>
    %c1_56 = arith.constant 1 : index
    %c8_57 = arith.constant 8 : index
    %c0_58 = arith.constant 0 : index
    %160 = vector.load %arg1[%c1_56, %c8_57, %c0_58] : memref<5x10x4xf32, #tpu.memory_space<vmem>>, vector<1x1x3xf32>
    %161 = vector.shape_cast %160 : vector<1x1x3xf32> to vector<1x3xf32>
    %c1_59 = arith.constant 1 : index
    %c9_60 = arith.constant 9 : index
    %c0_61 = arith.constant 0 : index
    %162 = vector.load %arg1[%c1_59, %c9_60, %c0_61] : memref<5x10x4xf32, #tpu.memory_space<vmem>>, vector<1x1x2xf32>
    %163 = vector.shape_cast %162 : vector<1x1x2xf32> to vector<1x2xf32>
    %cst_62 = arith.constant 0.000000e+00 : f32
    %164 = vector.broadcast %cst_62 : f32 to vector<16x2xf32>
    %165 = arith.maximumf %155, %164 : vector<16x2xf32>
    %166 = arith.truncf %165 : vector<16x2xf32> to vector<16x2xbf16>
    %167 = arith.truncf %157 : vector<2x3xf32> to vector<2x3xbf16>
    %cst_63 = arith.constant dense<0.000000e+00> : vector<16x3xf32>
    %168 = tpu.matmul %166, %167, %cst_63 {dimension_numbers = #tpu.dot_dimension_numbers<[1], [0], [0], [1], [0, 0, 1, 1], [], []>} : vector<16x2xbf16>, vector<2x3xbf16>, vector<16x3xf32> -> vector<16x3xf32>
    %169 = vector.broadcast %161 : vector<1x3xf32> to vector<16x3xf32>
    %170 = arith.addf %168, %169 : vector<16x3xf32>
    %c0_64 = arith.constant 0 : index
    %c0_65 = arith.constant 0 : index
    %171 = vector.load %arg3[%c0_64, %c0_65] : memref<16x3xf32, #tpu.memory_space<vmem>>, vector<16x3xf32>
    tpu.vector_store %arg3[%c0_64, %c0_65], %170 {strides = array<i32>} : memref<16x3xf32, #tpu.memory_space<vmem>>, vector<16x3xf32>,
    %c1_66 = arith.constant 1 : index
    %c2_67 = arith.constant 2 : index
    %c0_68 = arith.constant 0 : index
    %172 = vector.load %arg1[%c1_66, %c2_67, %c0_68] : memref<5x10x4xf32, #tpu.memory_space<vmem>>, vector<1x1x3xf32>
    %173 = vector.shape_cast %172 : vector<1x1x3xf32> to vector<1x3xf32>
    %174 = vector.shape_cast %173 : vector<1x3xf32> to vector<1x3xf32>
    %175 = vector.broadcast %174 : vector<1x3xf32> to vector<2x3xf32>
    %c1_69 = arith.constant 1 : index
    %c3_70 = arith.constant 3 : index
    %c0_71 = arith.constant 0 : index
    %176 = vector.load %arg1[%c1_69, %c3_70, %c0_71] : memref<5x10x4xf32, #tpu.memory_space<vmem>>, vector<1x1x3xf32>
    %177 = vector.shape_cast %176 : vector<1x1x3xf32> to vector<1x3xf32>
    %178 = vector.shape_cast %177 : vector<1x3xf32> to vector<1x3xf32>
    %179 = vector.broadcast %178 : vector<1x3xf32> to vector<2x3xf32>
    %c1_72 = arith.constant 1 : index
    %c4_73 = arith.constant 4 : index
    %c0_74 = arith.constant 0 : index
    %180 = vector.load %arg1[%c1_72, %c4_73, %c0_74] : memref<5x10x4xf32, #tpu.memory_space<vmem>>, vector<1x1x3xf32>
    %181 = vector.shape_cast %180 : vector<1x1x3xf32> to vector<1x3xf32>
    %182 = vector.shape_cast %181 : vector<1x3xf32> to vector<1x3xf32>
    %183 = vector.broadcast %182 : vector<1x3xf32> to vector<2x3xf32>
    %cst_75 = arith.constant 0.000000e+00 : f32
    %184 = vector.broadcast %cst_75 : f32 to vector<2x3xf32>
    %c0_76 = arith.constant 0 : index
    %c0_77 = arith.constant 0 : index
    %185 = vector.load %arg3[%c0_76, %c0_77] : memref<16x3xf32, #tpu.memory_space<vmem>>, vector<2x3xf32>
    %186 = vector.extract_strided_slice %184 {offsets = [0, 0], sizes = [2, 1], strides = [1, 1]} : vector<2x3xf32> to vector<2x1xf32>
    %187 = vector.broadcast %186 : vector<2x1xf32> to vector<2x3xf32>
    %188 = arith.mulf %187, %175 : vector<2x3xf32>
    %189 = arith.addf %185, %188 : vector<2x3xf32>
    %190 = vector.extract_strided_slice %184 {offsets = [0, 1], sizes = [2, 1], strides = [1, 1]} : vector<2x3xf32> to vector<2x1xf32>
    %191 = vector.broadcast %190 : vector<2x1xf32> to vector<2x3xf32>
    %192 = arith.mulf %191, %179 : vector<2x3xf32>
    %193 = arith.addf %189, %192 : vector<2x3xf32>
    %194 = vector.extract_strided_slice %184 {offsets = [0, 2], sizes = [2, 1], strides = [1, 1]} : vector<2x3xf32> to vector<2x1xf32>
    %195 = vector.broadcast %194 : vector<2x1xf32> to vector<2x3xf32>
    %196 = arith.mulf %195, %183 : vector<2x3xf32>
    %197 = arith.addf %193, %196 : vector<2x3xf32>
    %198 = math.tanh %197 : vector<2x3xf32>
    %c0_78 = arith.constant 0 : index
    %c0_79 = arith.constant 0 : index
    %199 = vector.load %arg4[%c0_78, %c0_79] : memref<16x3xf32, #tpu.memory_space<vmem>>, vector<2x3xf32>
    tpu.vector_store %arg4[%c0_78, %c0_79], %198 {strides = array<i32>} : memref<16x3xf32, #tpu.memory_space<vmem>>, vector<2x3xf32>,
    %c2_80 = arith.constant 2 : index
    %c0_81 = arith.constant 0 : index
    %200 = vector.load %arg3[%c2_80, %c0_81] : memref<16x3xf32, #tpu.memory_space<vmem>>, vector<2x3xf32>
    %201 = vector.extract_strided_slice %198 {offsets = [0, 0], sizes = [2, 1], strides = [1, 1]} : vector<2x3xf32> to vector<2x1xf32>
    %202 = vector.broadcast %201 : vector<2x1xf32> to vector<2x3xf32>
    %203 = arith.mulf %202, %175 : vector<2x3xf32>
    %204 = arith.addf %200, %203 : vector<2x3xf32>
    %205 = vector.extract_strided_slice %198 {offsets = [0, 1], sizes = [2, 1], strides = [1, 1]} : vector<2x3xf32> to vector<2x1xf32>
    %206 = vector.broadcast %205 : vector<2x1xf32> to vector<2x3xf32>
    %207 = arith.mulf %206, %179 : vector<2x3xf32>
    %208 = arith.addf %204, %207 : vector<2x3xf32>
    %209 = vector.extract_strided_slice %198 {offsets = [0, 2], sizes = [2, 1], strides = [1, 1]} : vector<2x3xf32> to vector<2x1xf32>
    %210 = vector.broadcast %209 : vector<2x1xf32> to vector<2x3xf32>
    %211 = arith.mulf %210, %183 : vector<2x3xf32>
    %212 = arith.addf %208, %211 : vector<2x3xf32>
    %213 = math.tanh %212 : vector<2x3xf32>
    %c2_82 = arith.constant 2 : index
    %c0_83 = arith.constant 0 : index
    %214 = vector.load %arg4[%c2_82, %c0_83] : memref<16x3xf32, #tpu.memory_space<vmem>>, vector<2x3xf32>
    tpu.vector_store %arg4[%c2_82, %c0_83], %213 {strides = array<i32>} : memref<16x3xf32, #tpu.memory_space<vmem>>, vector<2x3xf32>,
    %c4_84 = arith.constant 4 : index
    %c0_85 = arith.constant 0 : index
    %215 = vector.load %arg3[%c4_84, %c0_85] : memref<16x3xf32, #tpu.memory_space<vmem>>, vector<2x3xf32>
    %216 = vector.extract_strided_slice %213 {offsets = [0, 0], sizes = [2, 1], strides = [1, 1]} : vector<2x3xf32> to vector<2x1xf32>
    %217 = vector.broadcast %216 : vector<2x1xf32> to vector<2x3xf32>
    %218 = arith.mulf %217, %175 : vector<2x3xf32>
    %219 = arith.addf %215, %218 : vector<2x3xf32>
    %220 = vector.extract_strided_slice %213 {offsets = [0, 1], sizes = [2, 1], strides = [1, 1]} : vector<2x3xf32> to vector<2x1xf32>
    %221 = vector.broadcast %220 : vector<2x1xf32> to vector<2x3xf32>
    %222 = arith.mulf %221, %179 : vector<2x3xf32>
    %223 = arith.addf %219, %222 : vector<2x3xf32>
    %224 = vector.extract_strided_slice %213 {offsets = [0, 2], sizes = [2, 1], strides = [1, 1]} : vector<2x3xf32> to vector<2x1xf32>
    %225 = vector.broadcast %224 : vector<2x1xf32> to vector<2x3xf32>
    %226 = arith.mulf %225, %183 : vector<2x3xf32>
    %227 = arith.addf %223, %226 : vector<2x3xf32>
    %228 = math.tanh %227 : vector<2x3xf32>
    %c4_86 = arith.constant 4 : index
    %c0_87 = arith.constant 0 : index
    %229 = vector.load %arg4[%c4_86, %c0_87] : memref<16x3xf32, #tpu.memory_space<vmem>>, vector<2x3xf32>
    tpu.vector_store %arg4[%c4_86, %c0_87], %228 {strides = array<i32>} : memref<16x3xf32, #tpu.memory_space<vmem>>, vector<2x3xf32>,
    %c6_88 = arith.constant 6 : index
    %c0_89 = arith.constant 0 : index
    %230 = vector.load %arg3[%c6_88, %c0_89] : memref<16x3xf32, #tpu.memory_space<vmem>>, vector<2x3xf32>
    %231 = vector.extract_strided_slice %228 {offsets = [0, 0], sizes = [2, 1], strides = [1, 1]} : vector<2x3xf32> to vector<2x1xf32>
    %232 = vector.broadcast %231 : vector<2x1xf32> to vector<2x3xf32>
    %233 = arith.mulf %232, %175 : vector<2x3xf32>
    %234 = arith.addf %230, %233 : vector<2x3xf32>
    %235 = vector.extract_strided_slice %228 {offsets = [0, 1], sizes = [2, 1], strides = [1, 1]} : vector<2x3xf32> to vector<2x1xf32>
    %236 = vector.broadcast %235 : vector<2x1xf32> to vector<2x3xf32>
    %237 = arith.mulf %236, %179 : vector<2x3xf32>
    %238 = arith.addf %234, %237 : vector<2x3xf32>
    %239 = vector.extract_strided_slice %228 {offsets = [0, 2], sizes = [2, 1], strides = [1, 1]} : vector<2x3xf32> to vector<2x1xf32>
    %240 = vector.broadcast %239 : vector<2x1xf32> to vector<2x3xf32>
    %241 = arith.mulf %240, %183 : vector<2x3xf32>
    %242 = arith.addf %238, %241 : vector<2x3xf32>
    %243 = math.tanh %242 : vector<2x3xf32>
    %c6_90 = arith.constant 6 : index
    %c0_91 = arith.constant 0 : index
    %244 = vector.load %arg4[%c6_90, %c0_91] : memref<16x3xf32, #tpu.memory_space<vmem>>, vector<2x3xf32>
    tpu.vector_store %arg4[%c6_90, %c0_91], %243 {strides = array<i32>} : memref<16x3xf32, #tpu.memory_space<vmem>>, vector<2x3xf32>,
    %c8_92 = arith.constant 8 : index
    %c0_93 = arith.constant 0 : index
    %245 = vector.load %arg3[%c8_92, %c0_93] : memref<16x3xf32, #tpu.memory_space<vmem>>, vector<2x3xf32>
    %246 = vector.extract_strided_slice %243 {offsets = [0, 0], sizes = [2, 1], strides = [1, 1]} : vector<2x3xf32> to vector<2x1xf32>
    %247 = vector.broadcast %246 : vector<2x1xf32> to vector<2x3xf32>
    %248 = arith.mulf %247, %175 : vector<2x3xf32>
    %249 = arith.addf %245, %248 : vector<2x3xf32>
    %250 = vector.extract_strided_slice %243 {offsets = [0, 1], sizes = [2, 1], strides = [1, 1]} : vector<2x3xf32> to vector<2x1xf32>
    %251 = vector.broadcast %250 : vector<2x1xf32> to vector<2x3xf32>
    %252 = arith.mulf %251, %179 : vector<2x3xf32>
    %253 = arith.addf %249, %252 : vector<2x3xf32>
    %254 = vector.extract_strided_slice %243 {offsets = [0, 2], sizes = [2, 1], strides = [1, 1]} : vector<2x3xf32> to vector<2x1xf32>
    %255 = vector.broadcast %254 : vector<2x1xf32> to vector<2x3xf32>
    %256 = arith.mulf %255, %183 : vector<2x3xf32>
    %257 = arith.addf %253, %256 : vector<2x3xf32>
    %258 = math.tanh %257 : vector<2x3xf32>
    %c8_94 = arith.constant 8 : index
    %c0_95 = arith.constant 0 : index
    %259 = vector.load %arg4[%c8_94, %c0_95] : memref<16x3xf32, #tpu.memory_space<vmem>>, vector<2x3xf32>
    tpu.vector_store %arg4[%c8_94, %c0_95], %258 {strides = array<i32>} : memref<16x3xf32, #tpu.memory_space<vmem>>, vector<2x3xf32>,
    %c10_96 = arith.constant 10 : index
    %c0_97 = arith.constant 0 : index
    %260 = vector.load %arg3[%c10_96, %c0_97] : memref<16x3xf32, #tpu.memory_space<vmem>>, vector<2x3xf32>
    %261 = vector.extract_strided_slice %258 {offsets = [0, 0], sizes = [2, 1], strides = [1, 1]} : vector<2x3xf32> to vector<2x1xf32>
    %262 = vector.broadcast %261 : vector<2x1xf32> to vector<2x3xf32>
    %263 = arith.mulf %262, %175 : vector<2x3xf32>
    %264 = arith.addf %260, %263 : vector<2x3xf32>
    %265 = vector.extract_strided_slice %258 {offsets = [0, 1], sizes = [2, 1], strides = [1, 1]} : vector<2x3xf32> to vector<2x1xf32>
    %266 = vector.broadcast %265 : vector<2x1xf32> to vector<2x3xf32>
    %267 = arith.mulf %266, %179 : vector<2x3xf32>
    %268 = arith.addf %264, %267 : vector<2x3xf32>
    %269 = vector.extract_strided_slice %258 {offsets = [0, 2], sizes = [2, 1], strides = [1, 1]} : vector<2x3xf32> to vector<2x1xf32>
    %270 = vector.broadcast %269 : vector<2x1xf32> to vector<2x3xf32>
    %271 = arith.mulf %270, %183 : vector<2x3xf32>
    %272 = arith.addf %268, %271 : vector<2x3xf32>
    %273 = math.tanh %272 : vector<2x3xf32>
    %c10_98 = arith.constant 10 : index
    %c0_99 = arith.constant 0 : index
    %274 = vector.load %arg4[%c10_98, %c0_99] : memref<16x3xf32, #tpu.memory_space<vmem>>, vector<2x3xf32>
    tpu.vector_store %arg4[%c10_98, %c0_99], %273 {strides = array<i32>} : memref<16x3xf32, #tpu.memory_space<vmem>>, vector<2x3xf32>,
    %c12_100 = arith.constant 12 : index
    %c0_101 = arith.constant 0 : index
    %275 = vector.load %arg3[%c12_100, %c0_101] : memref<16x3xf32, #tpu.memory_space<vmem>>, vector<2x3xf32>
    %276 = vector.extract_strided_slice %273 {offsets = [0, 0], sizes = [2, 1], strides = [1, 1]} : vector<2x3xf32> to vector<2x1xf32>
    %277 = vector.broadcast %276 : vector<2x1xf32> to vector<2x3xf32>
    %278 = arith.mulf %277, %175 : vector<2x3xf32>
    %279 = arith.addf %275, %278 : vector<2x3xf32>
    %280 = vector.extract_strided_slice %273 {offsets = [0, 1], sizes = [2, 1], strides = [1, 1]} : vector<2x3xf32> to vector<2x1xf32>
    %281 = vector.broadcast %280 : vector<2x1xf32> to vector<2x3xf32>
    %282 = arith.mulf %281, %179 : vector<2x3xf32>
    %283 = arith.addf %279, %282 : vector<2x3xf32>
    %284 = vector.extract_strided_slice %273 {offsets = [0, 2], sizes = [2, 1], strides = [1, 1]} : vector<2x3xf32> to vector<2x1xf32>
    %285 = vector.broadcast %284 : vector<2x1xf32> to vector<2x3xf32>
    %286 = arith.mulf %285, %183 : vector<2x3xf32>
    %287 = arith.addf %283, %286 : vector<2x3xf32>
    %288 = math.tanh %287 : vector<2x3xf32>
    %c12_102 = arith.constant 12 : index
    %c0_103 = arith.constant 0 : index
    %289 = vector.load %arg4[%c12_102, %c0_103] : memref<16x3xf32, #tpu.memory_space<vmem>>, vector<2x3xf32>
    tpu.vector_store %arg4[%c12_102, %c0_103], %288 {strides = array<i32>} : memref<16x3xf32, #tpu.memory_space<vmem>>, vector<2x3xf32>,
    %c14_104 = arith.constant 14 : index
    %c0_105 = arith.constant 0 : index
    %290 = vector.load %arg3[%c14_104, %c0_105] : memref<16x3xf32, #tpu.memory_space<vmem>>, vector<2x3xf32>
    %291 = vector.extract_strided_slice %288 {offsets = [0, 0], sizes = [2, 1], strides = [1, 1]} : vector<2x3xf32> to vector<2x1xf32>
    %292 = vector.broadcast %291 : vector<2x1xf32> to vector<2x3xf32>
    %293 = arith.mulf %292, %175 : vector<2x3xf32>
    %294 = arith.addf %290, %293 : vector<2x3xf32>
    %295 = vector.extract_strided_slice %288 {offsets = [0, 1], sizes = [2, 1], strides = [1, 1]} : vector<2x3xf32> to vector<2x1xf32>
    %296 = vector.broadcast %295 : vector<2x1xf32> to vector<2x3xf32>
    %297 = arith.mulf %296, %179 : vector<2x3xf32>
    %298 = arith.addf %294, %297 : vector<2x3xf32>
    %299 = vector.extract_strided_slice %288 {offsets = [0, 2], sizes = [2, 1], strides = [1, 1]} : vector<2x3xf32> to vector<2x1xf32>
    %300 = vector.broadcast %299 : vector<2x1xf32> to vector<2x3xf32>
    %301 = arith.mulf %300, %183 : vector<2x3xf32>
    %302 = arith.addf %298, %301 : vector<2x3xf32>
    %303 = math.tanh %302 : vector<2x3xf32>
    %c14_106 = arith.constant 14 : index
    %c0_107 = arith.constant 0 : index
    %304 = vector.load %arg4[%c14_106, %c0_107] : memref<16x3xf32, #tpu.memory_space<vmem>>, vector<2x3xf32>
    tpu.vector_store %arg4[%c14_106, %c0_107], %303 {strides = array<i32>} : memref<16x3xf32, #tpu.memory_space<vmem>>, vector<2x3xf32>,
    %c0_108 = arith.constant 0 : index
    %c0_109 = arith.constant 0 : index
    %305 = vector.load %arg4[%c0_108, %c0_109] : memref<16x3xf32, #tpu.memory_space<vmem>>, vector<16x3xf32>
    %306 = arith.truncf %305 : vector<16x3xf32> to vector<16x3xbf16>
    %307 = arith.truncf %159 : vector<3x2xf32> to vector<3x2xbf16>
    %cst_110 = arith.constant dense<0.000000e+00> : vector<16x2xf32>
    %308 = tpu.matmul %306, %307, %cst_110 {dimension_numbers = #tpu.dot_dimension_numbers<[1], [0], [0], [1], [0, 0, 1, 1], [], []>} : vector<16x3xbf16>, vector<3x2xbf16>, vector<16x2xf32> -> vector<16x2xf32>
    %309 = vector.broadcast %163 : vector<1x2xf32> to vector<16x2xf32>
    %310 = arith.addf %308, %309 : vector<16x2xf32>
    %c2_111 = arith.constant 2 : index
    %c0_112 = arith.constant 0 : index
    %c0_113 = arith.constant 0 : index
    %311 = vector.load %arg1[%c2_111, %c0_112, %c0_113] : memref<5x10x4xf32, #tpu.memory_space<vmem>>, vector<1x2x3xf32>
    %312 = vector.shape_cast %311 : vector<1x2x3xf32> to vector<2x3xf32>
    %c2_114 = arith.constant 2 : index
    %c5_115 = arith.constant 5 : index
    %c0_116 = arith.constant 0 : index
    %313 = vector.load %arg1[%c2_114, %c5_115, %c0_116] : memref<5x10x4xf32, #tpu.memory_space<vmem>>, vector<1x3x2xf32>
    %314 = vector.shape_cast %313 : vector<1x3x2xf32> to vector<3x2xf32>
    %c2_117 = arith.constant 2 : index
    %c8_118 = arith.constant 8 : index
    %c0_119 = arith.constant 0 : index
    %315 = vector.load %arg1[%c2_117, %c8_118, %c0_119] : memref<5x10x4xf32, #tpu.memory_space<vmem>>, vector<1x1x3xf32>
    %316 = vector.shape_cast %315 : vector<1x1x3xf32> to vector<1x3xf32>
    %c2_120 = arith.constant 2 : index
    %c9_121 = arith.constant 9 : index
    %c0_122 = arith.constant 0 : index
    %317 = vector.load %arg1[%c2_120, %c9_121, %c0_122] : memref<5x10x4xf32, #tpu.memory_space<vmem>>, vector<1x1x2xf32>
    %318 = vector.shape_cast %317 : vector<1x1x2xf32> to vector<1x2xf32>
    %cst_123 = arith.constant 0.000000e+00 : f32
    %319 = vector.broadcast %cst_123 : f32 to vector<16x2xf32>
    %320 = arith.maximumf %310, %319 : vector<16x2xf32>
    %321 = arith.truncf %320 : vector<16x2xf32> to vector<16x2xbf16>
    %322 = arith.truncf %312 : vector<2x3xf32> to vector<2x3xbf16>
    %cst_124 = arith.constant dense<0.000000e+00> : vector<16x3xf32>
    %323 = tpu.matmul %321, %322, %cst_124 {dimension_numbers = #tpu.dot_dimension_numbers<[1], [0], [0], [1], [0, 0, 1, 1], [], []>} : vector<16x2xbf16>, vector<2x3xbf16>, vector<16x3xf32> -> vector<16x3xf32>
    %324 = vector.broadcast %316 : vector<1x3xf32> to vector<16x3xf32>
    %325 = arith.addf %323, %324 : vector<16x3xf32>
    %c0_125 = arith.constant 0 : index
    %c0_126 = arith.constant 0 : index
    %326 = vector.load %arg3[%c0_125, %c0_126] : memref<16x3xf32, #tpu.memory_space<vmem>>, vector<16x3xf32>
    tpu.vector_store %arg3[%c0_125, %c0_126], %325 {strides = array<i32>} : memref<16x3xf32, #tpu.memory_space<vmem>>, vector<16x3xf32>,
    %c2_127 = arith.constant 2 : index
    %c2_128 = arith.constant 2 : index
    %c0_129 = arith.constant 0 : index
    %327 = vector.load %arg1[%c2_127, %c2_128, %c0_129] : memref<5x10x4xf32, #tpu.memory_space<vmem>>, vector<1x1x3xf32>
    %328 = vector.shape_cast %327 : vector<1x1x3xf32> to vector<1x3xf32>
    %329 = vector.shape_cast %328 : vector<1x3xf32> to vector<1x3xf32>
    %330 = vector.broadcast %329 : vector<1x3xf32> to vector<2x3xf32>
    %c2_130 = arith.constant 2 : index
    %c3_131 = arith.constant 3 : index
    %c0_132 = arith.constant 0 : index
    %331 = vector.load %arg1[%c2_130, %c3_131, %c0_132] : memref<5x10x4xf32, #tpu.memory_space<vmem>>, vector<1x1x3xf32>
    %332 = vector.shape_cast %331 : vector<1x1x3xf32> to vector<1x3xf32>
    %333 = vector.shape_cast %332 : vector<1x3xf32> to vector<1x3xf32>
    %334 = vector.broadcast %333 : vector<1x3xf32> to vector<2x3xf32>
    %c2_133 = arith.constant 2 : index
    %c4_134 = arith.constant 4 : index
    %c0_135 = arith.constant 0 : index
    %335 = vector.load %arg1[%c2_133, %c4_134, %c0_135] : memref<5x10x4xf32, #tpu.memory_space<vmem>>, vector<1x1x3xf32>
    %336 = vector.shape_cast %335 : vector<1x1x3xf32> to vector<1x3xf32>
    %337 = vector.shape_cast %336 : vector<1x3xf32> to vector<1x3xf32>
    %338 = vector.broadcast %337 : vector<1x3xf32> to vector<2x3xf32>
    %cst_136 = arith.constant 0.000000e+00 : f32
    %339 = vector.broadcast %cst_136 : f32 to vector<2x3xf32>
    %c0_137 = arith.constant 0 : index
    %c0_138 = arith.constant 0 : index
    %340 = vector.load %arg3[%c0_137, %c0_138] : memref<16x3xf32, #tpu.memory_space<vmem>>, vector<2x3xf32>
    %341 = vector.extract_strided_slice %339 {offsets = [0, 0], sizes = [2, 1], strides = [1, 1]} : vector<2x3xf32> to vector<2x1xf32>
    %342 = vector.broadcast %341 : vector<2x1xf32> to vector<2x3xf32>
    %343 = arith.mulf %342, %330 : vector<2x3xf32>
    %344 = arith.addf %340, %343 : vector<2x3xf32>
    %345 = vector.extract_strided_slice %339 {offsets = [0, 1], sizes = [2, 1], strides = [1, 1]} : vector<2x3xf32> to vector<2x1xf32>
    %346 = vector.broadcast %345 : vector<2x1xf32> to vector<2x3xf32>
    %347 = arith.mulf %346, %334 : vector<2x3xf32>
    %348 = arith.addf %344, %347 : vector<2x3xf32>
    %349 = vector.extract_strided_slice %339 {offsets = [0, 2], sizes = [2, 1], strides = [1, 1]} : vector<2x3xf32> to vector<2x1xf32>
    %350 = vector.broadcast %349 : vector<2x1xf32> to vector<2x3xf32>
    %351 = arith.mulf %350, %338 : vector<2x3xf32>
    %352 = arith.addf %348, %351 : vector<2x3xf32>
    %353 = math.tanh %352 : vector<2x3xf32>
    %c0_139 = arith.constant 0 : index
    %c0_140 = arith.constant 0 : index
    %354 = vector.load %arg4[%c0_139, %c0_140] : memref<16x3xf32, #tpu.memory_space<vmem>>, vector<2x3xf32>
    tpu.vector_store %arg4[%c0_139, %c0_140], %353 {strides = array<i32>} : memref<16x3xf32, #tpu.memory_space<vmem>>, vector<2x3xf32>,
    %c2_141 = arith.constant 2 : index
    %c0_142 = arith.constant 0 : index
    %355 = vector.load %arg3[%c2_141, %c0_142] : memref<16x3xf32, #tpu.memory_space<vmem>>, vector<2x3xf32>
    %356 = vector.extract_strided_slice %353 {offsets = [0, 0], sizes = [2, 1], strides = [1, 1]} : vector<2x3xf32> to vector<2x1xf32>
    %357 = vector.broadcast %356 : vector<2x1xf32> to vector<2x3xf32>
    %358 = arith.mulf %357, %330 : vector<2x3xf32>
    %359 = arith.addf %355, %358 : vector<2x3xf32>
    %360 = vector.extract_strided_slice %353 {offsets = [0, 1], sizes = [2, 1], strides = [1, 1]} : vector<2x3xf32> to vector<2x1xf32>
    %361 = vector.broadcast %360 : vector<2x1xf32> to vector<2x3xf32>
    %362 = arith.mulf %361, %334 : vector<2x3xf32>
    %363 = arith.addf %359, %362 : vector<2x3xf32>
    %364 = vector.extract_strided_slice %353 {offsets = [0, 2], sizes = [2, 1], strides = [1, 1]} : vector<2x3xf32> to vector<2x1xf32>
    %365 = vector.broadcast %364 : vector<2x1xf32> to vector<2x3xf32>
    %366 = arith.mulf %365, %338 : vector<2x3xf32>
    %367 = arith.addf %363, %366 : vector<2x3xf32>
    %368 = math.tanh %367 : vector<2x3xf32>
    %c2_143 = arith.constant 2 : index
    %c0_144 = arith.constant 0 : index
    %369 = vector.load %arg4[%c2_143, %c0_144] : memref<16x3xf32, #tpu.memory_space<vmem>>, vector<2x3xf32>
    tpu.vector_store %arg4[%c2_143, %c0_144], %368 {strides = array<i32>} : memref<16x3xf32, #tpu.memory_space<vmem>>, vector<2x3xf32>,
    %c4_145 = arith.constant 4 : index
    %c0_146 = arith.constant 0 : index
    %370 = vector.load %arg3[%c4_145, %c0_146] : memref<16x3xf32, #tpu.memory_space<vmem>>, vector<2x3xf32>
    %371 = vector.extract_strided_slice %368 {offsets = [0, 0], sizes = [2, 1], strides = [1, 1]} : vector<2x3xf32> to vector<2x1xf32>
    %372 = vector.broadcast %371 : vector<2x1xf32> to vector<2x3xf32>
    %373 = arith.mulf %372, %330 : vector<2x3xf32>
    %374 = arith.addf %370, %373 : vector<2x3xf32>
    %375 = vector.extract_strided_slice %368 {offsets = [0, 1], sizes = [2, 1], strides = [1, 1]} : vector<2x3xf32> to vector<2x1xf32>
    %376 = vector.broadcast %375 : vector<2x1xf32> to vector<2x3xf32>
    %377 = arith.mulf %376, %334 : vector<2x3xf32>
    %378 = arith.addf %374, %377 : vector<2x3xf32>
    %379 = vector.extract_strided_slice %368 {offsets = [0, 2], sizes = [2, 1], strides = [1, 1]} : vector<2x3xf32> to vector<2x1xf32>
    %380 = vector.broadcast %379 : vector<2x1xf32> to vector<2x3xf32>
    %381 = arith.mulf %380, %338 : vector<2x3xf32>
    %382 = arith.addf %378, %381 : vector<2x3xf32>
    %383 = math.tanh %382 : vector<2x3xf32>
    %c4_147 = arith.constant 4 : index
    %c0_148 = arith.constant 0 : index
    %384 = vector.load %arg4[%c4_147, %c0_148] : memref<16x3xf32, #tpu.memory_space<vmem>>, vector<2x3xf32>
    tpu.vector_store %arg4[%c4_147, %c0_148], %383 {strides = array<i32>} : memref<16x3xf32, #tpu.memory_space<vmem>>, vector<2x3xf32>,
    %c6_149 = arith.constant 6 : index
    %c0_150 = arith.constant 0 : index
    %385 = vector.load %arg3[%c6_149, %c0_150] : memref<16x3xf32, #tpu.memory_space<vmem>>, vector<2x3xf32>
    %386 = vector.extract_strided_slice %383 {offsets = [0, 0], sizes = [2, 1], strides = [1, 1]} : vector<2x3xf32> to vector<2x1xf32>
    %387 = vector.broadcast %386 : vector<2x1xf32> to vector<2x3xf32>
    %388 = arith.mulf %387, %330 : vector<2x3xf32>
    %389 = arith.addf %385, %388 : vector<2x3xf32>
    %390 = vector.extract_strided_slice %383 {offsets = [0, 1], sizes = [2, 1], strides = [1, 1]} : vector<2x3xf32> to vector<2x1xf32>
    %391 = vector.broadcast %390 : vector<2x1xf32> to vector<2x3xf32>
    %392 = arith.mulf %391, %334 : vector<2x3xf32>
    %393 = arith.addf %389, %392 : vector<2x3xf32>
    %394 = vector.extract_strided_slice %383 {offsets = [0, 2], sizes = [2, 1], strides = [1, 1]} : vector<2x3xf32> to vector<2x1xf32>
    %395 = vector.broadcast %394 : vector<2x1xf32> to vector<2x3xf32>
    %396 = arith.mulf %395, %338 : vector<2x3xf32>
    %397 = arith.addf %393, %396 : vector<2x3xf32>
    %398 = math.tanh %397 : vector<2x3xf32>
    %c6_151 = arith.constant 6 : index
    %c0_152 = arith.constant 0 : index
    %399 = vector.load %arg4[%c6_151, %c0_152] : memref<16x3xf32, #tpu.memory_space<vmem>>, vector<2x3xf32>
    tpu.vector_store %arg4[%c6_151, %c0_152], %398 {strides = array<i32>} : memref<16x3xf32, #tpu.memory_space<vmem>>, vector<2x3xf32>,
    %c8_153 = arith.constant 8 : index
    %c0_154 = arith.constant 0 : index
    %400 = vector.load %arg3[%c8_153, %c0_154] : memref<16x3xf32, #tpu.memory_space<vmem>>, vector<2x3xf32>
    %401 = vector.extract_strided_slice %398 {offsets = [0, 0], sizes = [2, 1], strides = [1, 1]} : vector<2x3xf32> to vector<2x1xf32>
    %402 = vector.broadcast %401 : vector<2x1xf32> to vector<2x3xf32>
    %403 = arith.mulf %402, %330 : vector<2x3xf32>
    %404 = arith.addf %400, %403 : vector<2x3xf32>
    %405 = vector.extract_strided_slice %398 {offsets = [0, 1], sizes = [2, 1], strides = [1, 1]} : vector<2x3xf32> to vector<2x1xf32>
    %406 = vector.broadcast %405 : vector<2x1xf32> to vector<2x3xf32>
    %407 = arith.mulf %406, %334 : vector<2x3xf32>
    %408 = arith.addf %404, %407 : vector<2x3xf32>
    %409 = vector.extract_strided_slice %398 {offsets = [0, 2], sizes = [2, 1], strides = [1, 1]} : vector<2x3xf32> to vector<2x1xf32>
    %410 = vector.broadcast %409 : vector<2x1xf32> to vector<2x3xf32>
    %411 = arith.mulf %410, %338 : vector<2x3xf32>
    %412 = arith.addf %408, %411 : vector<2x3xf32>
    %413 = math.tanh %412 : vector<2x3xf32>
    %c8_155 = arith.constant 8 : index
    %c0_156 = arith.constant 0 : index
    %414 = vector.load %arg4[%c8_155, %c0_156] : memref<16x3xf32, #tpu.memory_space<vmem>>, vector<2x3xf32>
    tpu.vector_store %arg4[%c8_155, %c0_156], %413 {strides = array<i32>} : memref<16x3xf32, #tpu.memory_space<vmem>>, vector<2x3xf32>,
    %c10_157 = arith.constant 10 : index
    %c0_158 = arith.constant 0 : index
    %415 = vector.load %arg3[%c10_157, %c0_158] : memref<16x3xf32, #tpu.memory_space<vmem>>, vector<2x3xf32>
    %416 = vector.extract_strided_slice %413 {offsets = [0, 0], sizes = [2, 1], strides = [1, 1]} : vector<2x3xf32> to vector<2x1xf32>
    %417 = vector.broadcast %416 : vector<2x1xf32> to vector<2x3xf32>
    %418 = arith.mulf %417, %330 : vector<2x3xf32>
    %419 = arith.addf %415, %418 : vector<2x3xf32>
    %420 = vector.extract_strided_slice %413 {offsets = [0, 1], sizes = [2, 1], strides = [1, 1]} : vector<2x3xf32> to vector<2x1xf32>
    %421 = vector.broadcast %420 : vector<2x1xf32> to vector<2x3xf32>
    %422 = arith.mulf %421, %334 : vector<2x3xf32>
    %423 = arith.addf %419, %422 : vector<2x3xf32>
    %424 = vector.extract_strided_slice %413 {offsets = [0, 2], sizes = [2, 1], strides = [1, 1]} : vector<2x3xf32> to vector<2x1xf32>
    %425 = vector.broadcast %424 : vector<2x1xf32> to vector<2x3xf32>
    %426 = arith.mulf %425, %338 : vector<2x3xf32>
    %427 = arith.addf %423, %426 : vector<2x3xf32>
    %428 = math.tanh %427 : vector<2x3xf32>
    %c10_159 = arith.constant 10 : index
    %c0_160 = arith.constant 0 : index
    %429 = vector.load %arg4[%c10_159, %c0_160] : memref<16x3xf32, #tpu.memory_space<vmem>>, vector<2x3xf32>
    tpu.vector_store %arg4[%c10_159, %c0_160], %428 {strides = array<i32>} : memref<16x3xf32, #tpu.memory_space<vmem>>, vector<2x3xf32>,
    %c12_161 = arith.constant 12 : index
    %c0_162 = arith.constant 0 : index
    %430 = vector.load %arg3[%c12_161, %c0_162] : memref<16x3xf32, #tpu.memory_space<vmem>>, vector<2x3xf32>
    %431 = vector.extract_strided_slice %428 {offsets = [0, 0], sizes = [2, 1], strides = [1, 1]} : vector<2x3xf32> to vector<2x1xf32>
    %432 = vector.broadcast %431 : vector<2x1xf32> to vector<2x3xf32>
    %433 = arith.mulf %432, %330 : vector<2x3xf32>
    %434 = arith.addf %430, %433 : vector<2x3xf32>
    %435 = vector.extract_strided_slice %428 {offsets = [0, 1], sizes = [2, 1], strides = [1, 1]} : vector<2x3xf32> to vector<2x1xf32>
    %436 = vector.broadcast %435 : vector<2x1xf32> to vector<2x3xf32>
    %437 = arith.mulf %436, %334 : vector<2x3xf32>
    %438 = arith.addf %434, %437 : vector<2x3xf32>
    %439 = vector.extract_strided_slice %428 {offsets = [0, 2], sizes = [2, 1], strides = [1, 1]} : vector<2x3xf32> to vector<2x1xf32>
    %440 = vector.broadcast %439 : vector<2x1xf32> to vector<2x3xf32>
    %441 = arith.mulf %440, %338 : vector<2x3xf32>
    %442 = arith.addf %438, %441 : vector<2x3xf32>
    %443 = math.tanh %442 : vector<2x3xf32>
    %c12_163 = arith.constant 12 : index
    %c0_164 = arith.constant 0 : index
    %444 = vector.load %arg4[%c12_163, %c0_164] : memref<16x3xf32, #tpu.memory_space<vmem>>, vector<2x3xf32>
    tpu.vector_store %arg4[%c12_163, %c0_164], %443 {strides = array<i32>} : memref<16x3xf32, #tpu.memory_space<vmem>>, vector<2x3xf32>,
    %c14_165 = arith.constant 14 : index
    %c0_166 = arith.constant 0 : index
    %445 = vector.load %arg3[%c14_165, %c0_166] : memref<16x3xf32, #tpu.memory_space<vmem>>, vector<2x3xf32>
    %446 = vector.extract_strided_slice %443 {offsets = [0, 0], sizes = [2, 1], strides = [1, 1]} : vector<2x3xf32> to vector<2x1xf32>
    %447 = vector.broadcast %446 : vector<2x1xf32> to vector<2x3xf32>
    %448 = arith.mulf %447, %330 : vector<2x3xf32>
    %449 = arith.addf %445, %448 : vector<2x3xf32>
    %450 = vector.extract_strided_slice %443 {offsets = [0, 1], sizes = [2, 1], strides = [1, 1]} : vector<2x3xf32> to vector<2x1xf32>
    %451 = vector.broadcast %450 : vector<2x1xf32> to vector<2x3xf32>
    %452 = arith.mulf %451, %334 : vector<2x3xf32>
    %453 = arith.addf %449, %452 : vector<2x3xf32>
    %454 = vector.extract_strided_slice %443 {offsets = [0, 2], sizes = [2, 1], strides = [1, 1]} : vector<2x3xf32> to vector<2x1xf32>
    %455 = vector.broadcast %454 : vector<2x1xf32> to vector<2x3xf32>
    %456 = arith.mulf %455, %338 : vector<2x3xf32>
    %457 = arith.addf %453, %456 : vector<2x3xf32>
    %458 = math.tanh %457 : vector<2x3xf32>
    %c14_167 = arith.constant 14 : index
    %c0_168 = arith.constant 0 : index
    %459 = vector.load %arg4[%c14_167, %c0_168] : memref<16x3xf32, #tpu.memory_space<vmem>>, vector<2x3xf32>
    tpu.vector_store %arg4[%c14_167, %c0_168], %458 {strides = array<i32>} : memref<16x3xf32, #tpu.memory_space<vmem>>, vector<2x3xf32>,
    %c0_169 = arith.constant 0 : index
    %c0_170 = arith.constant 0 : index
    %460 = vector.load %arg4[%c0_169, %c0_170] : memref<16x3xf32, #tpu.memory_space<vmem>>, vector<16x3xf32>
    %461 = arith.truncf %460 : vector<16x3xf32> to vector<16x3xbf16>
    %462 = arith.truncf %314 : vector<3x2xf32> to vector<3x2xbf16>
    %cst_171 = arith.constant dense<0.000000e+00> : vector<16x2xf32>
    %463 = tpu.matmul %461, %462, %cst_171 {dimension_numbers = #tpu.dot_dimension_numbers<[1], [0], [0], [1], [0, 0, 1, 1], [], []>} : vector<16x3xbf16>, vector<3x2xbf16>, vector<16x2xf32> -> vector<16x2xf32>
    %464 = vector.broadcast %318 : vector<1x2xf32> to vector<16x2xf32>
    %465 = arith.addf %463, %464 : vector<16x2xf32>
    %c3_172 = arith.constant 3 : index
    %c0_173 = arith.constant 0 : index
    %c0_174 = arith.constant 0 : index
    %466 = vector.load %arg1[%c3_172, %c0_173, %c0_174] : memref<5x10x4xf32, #tpu.memory_space<vmem>>, vector<1x2x3xf32>
    %467 = vector.shape_cast %466 : vector<1x2x3xf32> to vector<2x3xf32>
    %c3_175 = arith.constant 3 : index
    %c5_176 = arith.constant 5 : index
    %c0_177 = arith.constant 0 : index
    %468 = vector.load %arg1[%c3_175, %c5_176, %c0_177] : memref<5x10x4xf32, #tpu.memory_space<vmem>>, vector<1x3x2xf32>
    %469 = vector.shape_cast %468 : vector<1x3x2xf32> to vector<3x2xf32>
    %c3_178 = arith.constant 3 : index
    %c8_179 = arith.constant 8 : index
    %c0_180 = arith.constant 0 : index
    %470 = vector.load %arg1[%c3_178, %c8_179, %c0_180] : memref<5x10x4xf32, #tpu.memory_space<vmem>>, vector<1x1x3xf32>
    %471 = vector.shape_cast %470 : vector<1x1x3xf32> to vector<1x3xf32>
    %c3_181 = arith.constant 3 : index
    %c9_182 = arith.constant 9 : index
    %c0_183 = arith.constant 0 : index
    %472 = vector.load %arg1[%c3_181, %c9_182, %c0_183] : memref<5x10x4xf32, #tpu.memory_space<vmem>>, vector<1x1x2xf32>
    %473 = vector.shape_cast %472 : vector<1x1x2xf32> to vector<1x2xf32>
    %cst_184 = arith.constant 0.000000e+00 : f32
    %474 = vector.broadcast %cst_184 : f32 to vector<16x2xf32>
    %475 = arith.maximumf %465, %474 : vector<16x2xf32>
    %476 = arith.truncf %475 : vector<16x2xf32> to vector<16x2xbf16>
    %477 = arith.truncf %467 : vector<2x3xf32> to vector<2x3xbf16>
    %cst_185 = arith.constant dense<0.000000e+00> : vector<16x3xf32>
    %478 = tpu.matmul %476, %477, %cst_185 {dimension_numbers = #tpu.dot_dimension_numbers<[1], [0], [0], [1], [0, 0, 1, 1], [], []>} : vector<16x2xbf16>, vector<2x3xbf16>, vector<16x3xf32> -> vector<16x3xf32>
    %479 = vector.broadcast %471 : vector<1x3xf32> to vector<16x3xf32>
    %480 = arith.addf %478, %479 : vector<16x3xf32>
    %c0_186 = arith.constant 0 : index
    %c0_187 = arith.constant 0 : index
    %481 = vector.load %arg3[%c0_186, %c0_187] : memref<16x3xf32, #tpu.memory_space<vmem>>, vector<16x3xf32>
    tpu.vector_store %arg3[%c0_186, %c0_187], %480 {strides = array<i32>} : memref<16x3xf32, #tpu.memory_space<vmem>>, vector<16x3xf32>,
    %c3_188 = arith.constant 3 : index
    %c2_189 = arith.constant 2 : index
    %c0_190 = arith.constant 0 : index
    %482 = vector.load %arg1[%c3_188, %c2_189, %c0_190] : memref<5x10x4xf32, #tpu.memory_space<vmem>>, vector<1x1x3xf32>
    %483 = vector.shape_cast %482 : vector<1x1x3xf32> to vector<1x3xf32>
    %484 = vector.shape_cast %483 : vector<1x3xf32> to vector<1x3xf32>
    %485 = vector.broadcast %484 : vector<1x3xf32> to vector<2x3xf32>
    %c3_191 = arith.constant 3 : index
    %c3_192 = arith.constant 3 : index
    %c0_193 = arith.constant 0 : index
    %486 = vector.load %arg1[%c3_191, %c3_192, %c0_193] : memref<5x10x4xf32, #tpu.memory_space<vmem>>, vector<1x1x3xf32>
    %487 = vector.shape_cast %486 : vector<1x1x3xf32> to vector<1x3xf32>
    %488 = vector.shape_cast %487 : vector<1x3xf32> to vector<1x3xf32>
    %489 = vector.broadcast %488 : vector<1x3xf32> to vector<2x3xf32>
    %c3_194 = arith.constant 3 : index
    %c4_195 = arith.constant 4 : index
    %c0_196 = arith.constant 0 : index
    %490 = vector.load %arg1[%c3_194, %c4_195, %c0_196] : memref<5x10x4xf32, #tpu.memory_space<vmem>>, vector<1x1x3xf32>
    %491 = vector.shape_cast %490 : vector<1x1x3xf32> to vector<1x3xf32>
    %492 = vector.shape_cast %491 : vector<1x3xf32> to vector<1x3xf32>
    %493 = vector.broadcast %492 : vector<1x3xf32> to vector<2x3xf32>
    %cst_197 = arith.constant 0.000000e+00 : f32
    %494 = vector.broadcast %cst_197 : f32 to vector<2x3xf32>
    %c0_198 = arith.constant 0 : index
    %c0_199 = arith.constant 0 : index
    %495 = vector.load %arg3[%c0_198, %c0_199] : memref<16x3xf32, #tpu.memory_space<vmem>>, vector<2x3xf32>
    %496 = vector.extract_strided_slice %494 {offsets = [0, 0], sizes = [2, 1], strides = [1, 1]} : vector<2x3xf32> to vector<2x1xf32>
    %497 = vector.broadcast %496 : vector<2x1xf32> to vector<2x3xf32>
    %498 = arith.mulf %497, %485 : vector<2x3xf32>
    %499 = arith.addf %495, %498 : vector<2x3xf32>
    %500 = vector.extract_strided_slice %494 {offsets = [0, 1], sizes = [2, 1], strides = [1, 1]} : vector<2x3xf32> to vector<2x1xf32>
    %501 = vector.broadcast %500 : vector<2x1xf32> to vector<2x3xf32>
    %502 = arith.mulf %501, %489 : vector<2x3xf32>
    %503 = arith.addf %499, %502 : vector<2x3xf32>
    %504 = vector.extract_strided_slice %494 {offsets = [0, 2], sizes = [2, 1], strides = [1, 1]} : vector<2x3xf32> to vector<2x1xf32>
    %505 = vector.broadcast %504 : vector<2x1xf32> to vector<2x3xf32>
    %506 = arith.mulf %505, %493 : vector<2x3xf32>
    %507 = arith.addf %503, %506 : vector<2x3xf32>
    %508 = math.tanh %507 : vector<2x3xf32>
    %c0_200 = arith.constant 0 : index
    %c0_201 = arith.constant 0 : index
    %509 = vector.load %arg4[%c0_200, %c0_201] : memref<16x3xf32, #tpu.memory_space<vmem>>, vector<2x3xf32>
    tpu.vector_store %arg4[%c0_200, %c0_201], %508 {strides = array<i32>} : memref<16x3xf32, #tpu.memory_space<vmem>>, vector<2x3xf32>,
    %c2_202 = arith.constant 2 : index
    %c0_203 = arith.constant 0 : index
    %510 = vector.load %arg3[%c2_202, %c0_203] : memref<16x3xf32, #tpu.memory_space<vmem>>, vector<2x3xf32>
    %511 = vector.extract_strided_slice %508 {offsets = [0, 0], sizes = [2, 1], strides = [1, 1]} : vector<2x3xf32> to vector<2x1xf32>
    %512 = vector.broadcast %511 : vector<2x1xf32> to vector<2x3xf32>
    %513 = arith.mulf %512, %485 : vector<2x3xf32>
    %514 = arith.addf %510, %513 : vector<2x3xf32>
    %515 = vector.extract_strided_slice %508 {offsets = [0, 1], sizes = [2, 1], strides = [1, 1]} : vector<2x3xf32> to vector<2x1xf32>
    %516 = vector.broadcast %515 : vector<2x1xf32> to vector<2x3xf32>
    %517 = arith.mulf %516, %489 : vector<2x3xf32>
    %518 = arith.addf %514, %517 : vector<2x3xf32>
    %519 = vector.extract_strided_slice %508 {offsets = [0, 2], sizes = [2, 1], strides = [1, 1]} : vector<2x3xf32> to vector<2x1xf32>
    %520 = vector.broadcast %519 : vector<2x1xf32> to vector<2x3xf32>
    %521 = arith.mulf %520, %493 : vector<2x3xf32>
    %522 = arith.addf %518, %521 : vector<2x3xf32>
    %523 = math.tanh %522 : vector<2x3xf32>
    %c2_204 = arith.constant 2 : index
    %c0_205 = arith.constant 0 : index
    %524 = vector.load %arg4[%c2_204, %c0_205] : memref<16x3xf32, #tpu.memory_space<vmem>>, vector<2x3xf32>
    tpu.vector_store %arg4[%c2_204, %c0_205], %523 {strides = array<i32>} : memref<16x3xf32, #tpu.memory_space<vmem>>, vector<2x3xf32>,
    %c4_206 = arith.constant 4 : index
    %c0_207 = arith.constant 0 : index
    %525 = vector.load %arg3[%c4_206, %c0_207] : memref<16x3xf32, #tpu.memory_space<vmem>>, vector<2x3xf32>
    %526 = vector.extract_strided_slice %523 {offsets = [0, 0], sizes = [2, 1], strides = [1, 1]} : vector<2x3xf32> to vector<2x1xf32>
    %527 = vector.broadcast %526 : vector<2x1xf32> to vector<2x3xf32>
    %528 = arith.mulf %527, %485 : vector<2x3xf32>
    %529 = arith.addf %525, %528 : vector<2x3xf32>
    %530 = vector.extract_strided_slice %523 {offsets = [0, 1], sizes = [2, 1], strides = [1, 1]} : vector<2x3xf32> to vector<2x1xf32>
    %531 = vector.broadcast %530 : vector<2x1xf32> to vector<2x3xf32>
    %532 = arith.mulf %531, %489 : vector<2x3xf32>
    %533 = arith.addf %529, %532 : vector<2x3xf32>
    %534 = vector.extract_strided_slice %523 {offsets = [0, 2], sizes = [2, 1], strides = [1, 1]} : vector<2x3xf32> to vector<2x1xf32>
    %535 = vector.broadcast %534 : vector<2x1xf32> to vector<2x3xf32>
    %536 = arith.mulf %535, %493 : vector<2x3xf32>
    %537 = arith.addf %533, %536 : vector<2x3xf32>
    %538 = math.tanh %537 : vector<2x3xf32>
    %c4_208 = arith.constant 4 : index
    %c0_209 = arith.constant 0 : index
    %539 = vector.load %arg4[%c4_208, %c0_209] : memref<16x3xf32, #tpu.memory_space<vmem>>, vector<2x3xf32>
    tpu.vector_store %arg4[%c4_208, %c0_209], %538 {strides = array<i32>} : memref<16x3xf32, #tpu.memory_space<vmem>>, vector<2x3xf32>,
    %c6_210 = arith.constant 6 : index
    %c0_211 = arith.constant 0 : index
    %540 = vector.load %arg3[%c6_210, %c0_211] : memref<16x3xf32, #tpu.memory_space<vmem>>, vector<2x3xf32>
    %541 = vector.extract_strided_slice %538 {offsets = [0, 0], sizes = [2, 1], strides = [1, 1]} : vector<2x3xf32> to vector<2x1xf32>
    %542 = vector.broadcast %541 : vector<2x1xf32> to vector<2x3xf32>
    %543 = arith.mulf %542, %485 : vector<2x3xf32>
    %544 = arith.addf %540, %543 : vector<2x3xf32>
    %545 = vector.extract_strided_slice %538 {offsets = [0, 1], sizes = [2, 1], strides = [1, 1]} : vector<2x3xf32> to vector<2x1xf32>
    %546 = vector.broadcast %545 : vector<2x1xf32> to vector<2x3xf32>
    %547 = arith.mulf %546, %489 : vector<2x3xf32>
    %548 = arith.addf %544, %547 : vector<2x3xf32>
    %549 = vector.extract_strided_slice %538 {offsets = [0, 2], sizes = [2, 1], strides = [1, 1]} : vector<2x3xf32> to vector<2x1xf32>
    %550 = vector.broadcast %549 : vector<2x1xf32> to vector<2x3xf32>
    %551 = arith.mulf %550, %493 : vector<2x3xf32>
    %552 = arith.addf %548, %551 : vector<2x3xf32>
    %553 = math.tanh %552 : vector<2x3xf32>
    %c6_212 = arith.constant 6 : index
    %c0_213 = arith.constant 0 : index
    %554 = vector.load %arg4[%c6_212, %c0_213] : memref<16x3xf32, #tpu.memory_space<vmem>>, vector<2x3xf32>
    tpu.vector_store %arg4[%c6_212, %c0_213], %553 {strides = array<i32>} : memref<16x3xf32, #tpu.memory_space<vmem>>, vector<2x3xf32>,
    %c8_214 = arith.constant 8 : index
    %c0_215 = arith.constant 0 : index
    %555 = vector.load %arg3[%c8_214, %c0_215] : memref<16x3xf32, #tpu.memory_space<vmem>>, vector<2x3xf32>
    %556 = vector.extract_strided_slice %553 {offsets = [0, 0], sizes = [2, 1], strides = [1, 1]} : vector<2x3xf32> to vector<2x1xf32>
    %557 = vector.broadcast %556 : vector<2x1xf32> to vector<2x3xf32>
    %558 = arith.mulf %557, %485 : vector<2x3xf32>
    %559 = arith.addf %555, %558 : vector<2x3xf32>
    %560 = vector.extract_strided_slice %553 {offsets = [0, 1], sizes = [2, 1], strides = [1, 1]} : vector<2x3xf32> to vector<2x1xf32>
    %561 = vector.broadcast %560 : vector<2x1xf32> to vector<2x3xf32>
    %562 = arith.mulf %561, %489 : vector<2x3xf32>
    %563 = arith.addf %559, %562 : vector<2x3xf32>
    %564 = vector.extract_strided_slice %553 {offsets = [0, 2], sizes = [2, 1], strides = [1, 1]} : vector<2x3xf32> to vector<2x1xf32>
    %565 = vector.broadcast %564 : vector<2x1xf32> to vector<2x3xf32>
    %566 = arith.mulf %565, %493 : vector<2x3xf32>
    %567 = arith.addf %563, %566 : vector<2x3xf32>
    %568 = math.tanh %567 : vector<2x3xf32>
    %c8_216 = arith.constant 8 : index
    %c0_217 = arith.constant 0 : index
    %569 = vector.load %arg4[%c8_216, %c0_217] : memref<16x3xf32, #tpu.memory_space<vmem>>, vector<2x3xf32>
    tpu.vector_store %arg4[%c8_216, %c0_217], %568 {strides = array<i32>} : memref<16x3xf32, #tpu.memory_space<vmem>>, vector<2x3xf32>,
    %c10_218 = arith.constant 10 : index
    %c0_219 = arith.constant 0 : index
    %570 = vector.load %arg3[%c10_218, %c0_219] : memref<16x3xf32, #tpu.memory_space<vmem>>, vector<2x3xf32>
    %571 = vector.extract_strided_slice %568 {offsets = [0, 0], sizes = [2, 1], strides = [1, 1]} : vector<2x3xf32> to vector<2x1xf32>
    %572 = vector.broadcast %571 : vector<2x1xf32> to vector<2x3xf32>
    %573 = arith.mulf %572, %485 : vector<2x3xf32>
    %574 = arith.addf %570, %573 : vector<2x3xf32>
    %575 = vector.extract_strided_slice %568 {offsets = [0, 1], sizes = [2, 1], strides = [1, 1]} : vector<2x3xf32> to vector<2x1xf32>
    %576 = vector.broadcast %575 : vector<2x1xf32> to vector<2x3xf32>
    %577 = arith.mulf %576, %489 : vector<2x3xf32>
    %578 = arith.addf %574, %577 : vector<2x3xf32>
    %579 = vector.extract_strided_slice %568 {offsets = [0, 2], sizes = [2, 1], strides = [1, 1]} : vector<2x3xf32> to vector<2x1xf32>
    %580 = vector.broadcast %579 : vector<2x1xf32> to vector<2x3xf32>
    %581 = arith.mulf %580, %493 : vector<2x3xf32>
    %582 = arith.addf %578, %581 : vector<2x3xf32>
    %583 = math.tanh %582 : vector<2x3xf32>
    %c10_220 = arith.constant 10 : index
    %c0_221 = arith.constant 0 : index
    %584 = vector.load %arg4[%c10_220, %c0_221] : memref<16x3xf32, #tpu.memory_space<vmem>>, vector<2x3xf32>
    tpu.vector_store %arg4[%c10_220, %c0_221], %583 {strides = array<i32>} : memref<16x3xf32, #tpu.memory_space<vmem>>, vector<2x3xf32>,
    %c12_222 = arith.constant 12 : index
    %c0_223 = arith.constant 0 : index
    %585 = vector.load %arg3[%c12_222, %c0_223] : memref<16x3xf32, #tpu.memory_space<vmem>>, vector<2x3xf32>
    %586 = vector.extract_strided_slice %583 {offsets = [0, 0], sizes = [2, 1], strides = [1, 1]} : vector<2x3xf32> to vector<2x1xf32>
    %587 = vector.broadcast %586 : vector<2x1xf32> to vector<2x3xf32>
    %588 = arith.mulf %587, %485 : vector<2x3xf32>
    %589 = arith.addf %585, %588 : vector<2x3xf32>
    %590 = vector.extract_strided_slice %583 {offsets = [0, 1], sizes = [2, 1], strides = [1, 1]} : vector<2x3xf32> to vector<2x1xf32>
    %591 = vector.broadcast %590 : vector<2x1xf32> to vector<2x3xf32>
    %592 = arith.mulf %591, %489 : vector<2x3xf32>
    %593 = arith.addf %589, %592 : vector<2x3xf32>
    %594 = vector.extract_strided_slice %583 {offsets = [0, 2], sizes = [2, 1], strides = [1, 1]} : vector<2x3xf32> to vector<2x1xf32>
    %595 = vector.broadcast %594 : vector<2x1xf32> to vector<2x3xf32>
    %596 = arith.mulf %595, %493 : vector<2x3xf32>
    %597 = arith.addf %593, %596 : vector<2x3xf32>
    %598 = math.tanh %597 : vector<2x3xf32>
    %c12_224 = arith.constant 12 : index
    %c0_225 = arith.constant 0 : index
    %599 = vector.load %arg4[%c12_224, %c0_225] : memref<16x3xf32, #tpu.memory_space<vmem>>, vector<2x3xf32>
    tpu.vector_store %arg4[%c12_224, %c0_225], %598 {strides = array<i32>} : memref<16x3xf32, #tpu.memory_space<vmem>>, vector<2x3xf32>,
    %c14_226 = arith.constant 14 : index
    %c0_227 = arith.constant 0 : index
    %600 = vector.load %arg3[%c14_226, %c0_227] : memref<16x3xf32, #tpu.memory_space<vmem>>, vector<2x3xf32>
    %601 = vector.extract_strided_slice %598 {offsets = [0, 0], sizes = [2, 1], strides = [1, 1]} : vector<2x3xf32> to vector<2x1xf32>
    %602 = vector.broadcast %601 : vector<2x1xf32> to vector<2x3xf32>
    %603 = arith.mulf %602, %485 : vector<2x3xf32>
    %604 = arith.addf %600, %603 : vector<2x3xf32>
    %605 = vector.extract_strided_slice %598 {offsets = [0, 1], sizes = [2, 1], strides = [1, 1]} : vector<2x3xf32> to vector<2x1xf32>
    %606 = vector.broadcast %605 : vector<2x1xf32> to vector<2x3xf32>
    %607 = arith.mulf %606, %489 : vector<2x3xf32>
    %608 = arith.addf %604, %607 : vector<2x3xf32>
    %609 = vector.extract_strided_slice %598 {offsets = [0, 2], sizes = [2, 1], strides = [1, 1]} : vector<2x3xf32> to vector<2x1xf32>
    %610 = vector.broadcast %609 : vector<2x1xf32> to vector<2x3xf32>
    %611 = arith.mulf %610, %493 : vector<2x3xf32>
    %612 = arith.addf %608, %611 : vector<2x3xf32>
    %613 = math.tanh %612 : vector<2x3xf32>
    %c14_228 = arith.constant 14 : index
    %c0_229 = arith.constant 0 : index
    %614 = vector.load %arg4[%c14_228, %c0_229] : memref<16x3xf32, #tpu.memory_space<vmem>>, vector<2x3xf32>
    tpu.vector_store %arg4[%c14_228, %c0_229], %613 {strides = array<i32>} : memref<16x3xf32, #tpu.memory_space<vmem>>, vector<2x3xf32>,
    %c0_230 = arith.constant 0 : index
    %c0_231 = arith.constant 0 : index
    %615 = vector.load %arg4[%c0_230, %c0_231] : memref<16x3xf32, #tpu.memory_space<vmem>>, vector<16x3xf32>
    %616 = arith.truncf %615 : vector<16x3xf32> to vector<16x3xbf16>
    %617 = arith.truncf %469 : vector<3x2xf32> to vector<3x2xbf16>
    %cst_232 = arith.constant dense<0.000000e+00> : vector<16x2xf32>
    %618 = tpu.matmul %616, %617, %cst_232 {dimension_numbers = #tpu.dot_dimension_numbers<[1], [0], [0], [1], [0, 0, 1, 1], [], []>} : vector<16x3xbf16>, vector<3x2xbf16>, vector<16x2xf32> -> vector<16x2xf32>
    %619 = vector.broadcast %473 : vector<1x2xf32> to vector<16x2xf32>
    %620 = arith.addf %618, %619 : vector<16x2xf32>
    %c4_233 = arith.constant 4 : index
    %c0_234 = arith.constant 0 : index
    %c0_235 = arith.constant 0 : index
    %621 = vector.load %arg1[%c4_233, %c0_234, %c0_235] : memref<5x10x4xf32, #tpu.memory_space<vmem>>, vector<1x2x3xf32>
    %622 = vector.shape_cast %621 : vector<1x2x3xf32> to vector<2x3xf32>
    %c4_236 = arith.constant 4 : index
    %c5_237 = arith.constant 5 : index
    %c0_238 = arith.constant 0 : index
    %623 = vector.load %arg1[%c4_236, %c5_237, %c0_238] : memref<5x10x4xf32, #tpu.memory_space<vmem>>, vector<1x3x2xf32>
    %624 = vector.shape_cast %623 : vector<1x3x2xf32> to vector<3x2xf32>
    %c4_239 = arith.constant 4 : index
    %c8_240 = arith.constant 8 : index
    %c0_241 = arith.constant 0 : index
    %625 = vector.load %arg1[%c4_239, %c8_240, %c0_241] : memref<5x10x4xf32, #tpu.memory_space<vmem>>, vector<1x1x3xf32>
    %626 = vector.shape_cast %625 : vector<1x1x3xf32> to vector<1x3xf32>
    %c4_242 = arith.constant 4 : index
    %c9_243 = arith.constant 9 : index
    %c0_244 = arith.constant 0 : index
    %627 = vector.load %arg1[%c4_242, %c9_243, %c0_244] : memref<5x10x4xf32, #tpu.memory_space<vmem>>, vector<1x1x2xf32>
    %628 = vector.shape_cast %627 : vector<1x1x2xf32> to vector<1x2xf32>
    %cst_245 = arith.constant 0.000000e+00 : f32
    %629 = vector.broadcast %cst_245 : f32 to vector<16x2xf32>
    %630 = arith.maximumf %620, %629 : vector<16x2xf32>
    %631 = arith.truncf %630 : vector<16x2xf32> to vector<16x2xbf16>
    %632 = arith.truncf %622 : vector<2x3xf32> to vector<2x3xbf16>
    %cst_246 = arith.constant dense<0.000000e+00> : vector<16x3xf32>
    %633 = tpu.matmul %631, %632, %cst_246 {dimension_numbers = #tpu.dot_dimension_numbers<[1], [0], [0], [1], [0, 0, 1, 1], [], []>} : vector<16x2xbf16>, vector<2x3xbf16>, vector<16x3xf32> -> vector<16x3xf32>
    %634 = vector.broadcast %626 : vector<1x3xf32> to vector<16x3xf32>
    %635 = arith.addf %633, %634 : vector<16x3xf32>
    %c0_247 = arith.constant 0 : index
    %c0_248 = arith.constant 0 : index
    %636 = vector.load %arg3[%c0_247, %c0_248] : memref<16x3xf32, #tpu.memory_space<vmem>>, vector<16x3xf32>
    tpu.vector_store %arg3[%c0_247, %c0_248], %635 {strides = array<i32>} : memref<16x3xf32, #tpu.memory_space<vmem>>, vector<16x3xf32>,
    %c4_249 = arith.constant 4 : index
    %c2_250 = arith.constant 2 : index
    %c0_251 = arith.constant 0 : index
    %637 = vector.load %arg1[%c4_249, %c2_250, %c0_251] : memref<5x10x4xf32, #tpu.memory_space<vmem>>, vector<1x1x3xf32>
    %638 = vector.shape_cast %637 : vector<1x1x3xf32> to vector<1x3xf32>
    %639 = vector.shape_cast %638 : vector<1x3xf32> to vector<1x3xf32>
    %640 = vector.broadcast %639 : vector<1x3xf32> to vector<2x3xf32>
    %c4_252 = arith.constant 4 : index
    %c3_253 = arith.constant 3 : index
    %c0_254 = arith.constant 0 : index
    %641 = vector.load %arg1[%c4_252, %c3_253, %c0_254] : memref<5x10x4xf32, #tpu.memory_space<vmem>>, vector<1x1x3xf32>
    %642 = vector.shape_cast %641 : vector<1x1x3xf32> to vector<1x3xf32>
    %643 = vector.shape_cast %642 : vector<1x3xf32> to vector<1x3xf32>
    %644 = vector.broadcast %643 : vector<1x3xf32> to vector<2x3xf32>
    %c4_255 = arith.constant 4 : index
    %c4_256 = arith.constant 4 : index
    %c0_257 = arith.constant 0 : index
    %645 = vector.load %arg1[%c4_255, %c4_256, %c0_257] : memref<5x10x4xf32, #tpu.memory_space<vmem>>, vector<1x1x3xf32>
    %646 = vector.shape_cast %645 : vector<1x1x3xf32> to vector<1x3xf32>
    %647 = vector.shape_cast %646 : vector<1x3xf32> to vector<1x3xf32>
    %648 = vector.broadcast %647 : vector<1x3xf32> to vector<2x3xf32>
    %cst_258 = arith.constant 0.000000e+00 : f32
    %649 = vector.broadcast %cst_258 : f32 to vector<2x3xf32>
    %c0_259 = arith.constant 0 : index
    %c0_260 = arith.constant 0 : index
    %650 = vector.load %arg3[%c0_259, %c0_260] : memref<16x3xf32, #tpu.memory_space<vmem>>, vector<2x3xf32>
    %651 = vector.extract_strided_slice %649 {offsets = [0, 0], sizes = [2, 1], strides = [1, 1]} : vector<2x3xf32> to vector<2x1xf32>
    %652 = vector.broadcast %651 : vector<2x1xf32> to vector<2x3xf32>
    %653 = arith.mulf %652, %640 : vector<2x3xf32>
    %654 = arith.addf %650, %653 : vector<2x3xf32>
    %655 = vector.extract_strided_slice %649 {offsets = [0, 1], sizes = [2, 1], strides = [1, 1]} : vector<2x3xf32> to vector<2x1xf32>
    %656 = vector.broadcast %655 : vector<2x1xf32> to vector<2x3xf32>
    %657 = arith.mulf %656, %644 : vector<2x3xf32>
    %658 = arith.addf %654, %657 : vector<2x3xf32>
    %659 = vector.extract_strided_slice %649 {offsets = [0, 2], sizes = [2, 1], strides = [1, 1]} : vector<2x3xf32> to vector<2x1xf32>
    %660 = vector.broadcast %659 : vector<2x1xf32> to vector<2x3xf32>
    %661 = arith.mulf %660, %648 : vector<2x3xf32>
    %662 = arith.addf %658, %661 : vector<2x3xf32>
    %663 = math.tanh %662 : vector<2x3xf32>
    %c0_261 = arith.constant 0 : index
    %c0_262 = arith.constant 0 : index
    %664 = vector.load %arg4[%c0_261, %c0_262] : memref<16x3xf32, #tpu.memory_space<vmem>>, vector<2x3xf32>
    tpu.vector_store %arg4[%c0_261, %c0_262], %663 {strides = array<i32>} : memref<16x3xf32, #tpu.memory_space<vmem>>, vector<2x3xf32>,
    %c2_263 = arith.constant 2 : index
    %c0_264 = arith.constant 0 : index
    %665 = vector.load %arg3[%c2_263, %c0_264] : memref<16x3xf32, #tpu.memory_space<vmem>>, vector<2x3xf32>
    %666 = vector.extract_strided_slice %663 {offsets = [0, 0], sizes = [2, 1], strides = [1, 1]} : vector<2x3xf32> to vector<2x1xf32>
    %667 = vector.broadcast %666 : vector<2x1xf32> to vector<2x3xf32>
    %668 = arith.mulf %667, %640 : vector<2x3xf32>
    %669 = arith.addf %665, %668 : vector<2x3xf32>
    %670 = vector.extract_strided_slice %663 {offsets = [0, 1], sizes = [2, 1], strides = [1, 1]} : vector<2x3xf32> to vector<2x1xf32>
    %671 = vector.broadcast %670 : vector<2x1xf32> to vector<2x3xf32>
    %672 = arith.mulf %671, %644 : vector<2x3xf32>
    %673 = arith.addf %669, %672 : vector<2x3xf32>
    %674 = vector.extract_strided_slice %663 {offsets = [0, 2], sizes = [2, 1], strides = [1, 1]} : vector<2x3xf32> to vector<2x1xf32>
    %675 = vector.broadcast %674 : vector<2x1xf32> to vector<2x3xf32>
    %676 = arith.mulf %675, %648 : vector<2x3xf32>
    %677 = arith.addf %673, %676 : vector<2x3xf32>
    %678 = math.tanh %677 : vector<2x3xf32>
    %c2_265 = arith.constant 2 : index
    %c0_266 = arith.constant 0 : index
    %679 = vector.load %arg4[%c2_265, %c0_266] : memref<16x3xf32, #tpu.memory_space<vmem>>, vector<2x3xf32>
    tpu.vector_store %arg4[%c2_265, %c0_266], %678 {strides = array<i32>} : memref<16x3xf32, #tpu.memory_space<vmem>>, vector<2x3xf32>,
    %c4_267 = arith.constant 4 : index
    %c0_268 = arith.constant 0 : index
    %680 = vector.load %arg3[%c4_267, %c0_268] : memref<16x3xf32, #tpu.memory_space<vmem>>, vector<2x3xf32>
    %681 = vector.extract_strided_slice %678 {offsets = [0, 0], sizes = [2, 1], strides = [1, 1]} : vector<2x3xf32> to vector<2x1xf32>
    %682 = vector.broadcast %681 : vector<2x1xf32> to vector<2x3xf32>
    %683 = arith.mulf %682, %640 : vector<2x3xf32>
    %684 = arith.addf %680, %683 : vector<2x3xf32>
    %685 = vector.extract_strided_slice %678 {offsets = [0, 1], sizes = [2, 1], strides = [1, 1]} : vector<2x3xf32> to vector<2x1xf32>
    %686 = vector.broadcast %685 : vector<2x1xf32> to vector<2x3xf32>
    %687 = arith.mulf %686, %644 : vector<2x3xf32>
    %688 = arith.addf %684, %687 : vector<2x3xf32>
    %689 = vector.extract_strided_slice %678 {offsets = [0, 2], sizes = [2, 1], strides = [1, 1]} : vector<2x3xf32> to vector<2x1xf32>
    %690 = vector.broadcast %689 : vector<2x1xf32> to vector<2x3xf32>
    %691 = arith.mulf %690, %648 : vector<2x3xf32>
    %692 = arith.addf %688, %691 : vector<2x3xf32>
    %693 = math.tanh %692 : vector<2x3xf32>
    %c4_269 = arith.constant 4 : index
    %c0_270 = arith.constant 0 : index
    %694 = vector.load %arg4[%c4_269, %c0_270] : memref<16x3xf32, #tpu.memory_space<vmem>>, vector<2x3xf32>
    tpu.vector_store %arg4[%c4_269, %c0_270], %693 {strides = array<i32>} : memref<16x3xf32, #tpu.memory_space<vmem>>, vector<2x3xf32>,
    %c6_271 = arith.constant 6 : index
    %c0_272 = arith.constant 0 : index
    %695 = vector.load %arg3[%c6_271, %c0_272] : memref<16x3xf32, #tpu.memory_space<vmem>>, vector<2x3xf32>
    %696 = vector.extract_strided_slice %693 {offsets = [0, 0], sizes = [2, 1], strides = [1, 1]} : vector<2x3xf32> to vector<2x1xf32>
    %697 = vector.broadcast %696 : vector<2x1xf32> to vector<2x3xf32>
    %698 = arith.mulf %697, %640 : vector<2x3xf32>
    %699 = arith.addf %695, %698 : vector<2x3xf32>
    %700 = vector.extract_strided_slice %693 {offsets = [0, 1], sizes = [2, 1], strides = [1, 1]} : vector<2x3xf32> to vector<2x1xf32>
    %701 = vector.broadcast %700 : vector<2x1xf32> to vector<2x3xf32>
    %702 = arith.mulf %701, %644 : vector<2x3xf32>
    %703 = arith.addf %699, %702 : vector<2x3xf32>
    %704 = vector.extract_strided_slice %693 {offsets = [0, 2], sizes = [2, 1], strides = [1, 1]} : vector<2x3xf32> to vector<2x1xf32>
    %705 = vector.broadcast %704 : vector<2x1xf32> to vector<2x3xf32>
    %706 = arith.mulf %705, %648 : vector<2x3xf32>
    %707 = arith.addf %703, %706 : vector<2x3xf32>
    %708 = math.tanh %707 : vector<2x3xf32>
    %c6_273 = arith.constant 6 : index
    %c0_274 = arith.constant 0 : index
    %709 = vector.load %arg4[%c6_273, %c0_274] : memref<16x3xf32, #tpu.memory_space<vmem>>, vector<2x3xf32>
    tpu.vector_store %arg4[%c6_273, %c0_274], %708 {strides = array<i32>} : memref<16x3xf32, #tpu.memory_space<vmem>>, vector<2x3xf32>,
    %c8_275 = arith.constant 8 : index
    %c0_276 = arith.constant 0 : index
    %710 = vector.load %arg3[%c8_275, %c0_276] : memref<16x3xf32, #tpu.memory_space<vmem>>, vector<2x3xf32>
    %711 = vector.extract_strided_slice %708 {offsets = [0, 0], sizes = [2, 1], strides = [1, 1]} : vector<2x3xf32> to vector<2x1xf32>
    %712 = vector.broadcast %711 : vector<2x1xf32> to vector<2x3xf32>
    %713 = arith.mulf %712, %640 : vector<2x3xf32>
    %714 = arith.addf %710, %713 : vector<2x3xf32>
    %715 = vector.extract_strided_slice %708 {offsets = [0, 1], sizes = [2, 1], strides = [1, 1]} : vector<2x3xf32> to vector<2x1xf32>
    %716 = vector.broadcast %715 : vector<2x1xf32> to vector<2x3xf32>
    %717 = arith.mulf %716, %644 : vector<2x3xf32>
    %718 = arith.addf %714, %717 : vector<2x3xf32>
    %719 = vector.extract_strided_slice %708 {offsets = [0, 2], sizes = [2, 1], strides = [1, 1]} : vector<2x3xf32> to vector<2x1xf32>
    %720 = vector.broadcast %719 : vector<2x1xf32> to vector<2x3xf32>
    %721 = arith.mulf %720, %648 : vector<2x3xf32>
    %722 = arith.addf %718, %721 : vector<2x3xf32>
    %723 = math.tanh %722 : vector<2x3xf32>
    %c8_277 = arith.constant 8 : index
    %c0_278 = arith.constant 0 : index
    %724 = vector.load %arg4[%c8_277, %c0_278] : memref<16x3xf32, #tpu.memory_space<vmem>>, vector<2x3xf32>
    tpu.vector_store %arg4[%c8_277, %c0_278], %723 {strides = array<i32>} : memref<16x3xf32, #tpu.memory_space<vmem>>, vector<2x3xf32>,
    %c10_279 = arith.constant 10 : index
    %c0_280 = arith.constant 0 : index
    %725 = vector.load %arg3[%c10_279, %c0_280] : memref<16x3xf32, #tpu.memory_space<vmem>>, vector<2x3xf32>
    %726 = vector.extract_strided_slice %723 {offsets = [0, 0], sizes = [2, 1], strides = [1, 1]} : vector<2x3xf32> to vector<2x1xf32>
    %727 = vector.broadcast %726 : vector<2x1xf32> to vector<2x3xf32>
    %728 = arith.mulf %727, %640 : vector<2x3xf32>
    %729 = arith.addf %725, %728 : vector<2x3xf32>
    %730 = vector.extract_strided_slice %723 {offsets = [0, 1], sizes = [2, 1], strides = [1, 1]} : vector<2x3xf32> to vector<2x1xf32>
    %731 = vector.broadcast %730 : vector<2x1xf32> to vector<2x3xf32>
    %732 = arith.mulf %731, %644 : vector<2x3xf32>
    %733 = arith.addf %729, %732 : vector<2x3xf32>
    %734 = vector.extract_strided_slice %723 {offsets = [0, 2], sizes = [2, 1], strides = [1, 1]} : vector<2x3xf32> to vector<2x1xf32>
    %735 = vector.broadcast %734 : vector<2x1xf32> to vector<2x3xf32>
    %736 = arith.mulf %735, %648 : vector<2x3xf32>
    %737 = arith.addf %733, %736 : vector<2x3xf32>
    %738 = math.tanh %737 : vector<2x3xf32>
    %c10_281 = arith.constant 10 : index
    %c0_282 = arith.constant 0 : index
    %739 = vector.load %arg4[%c10_281, %c0_282] : memref<16x3xf32, #tpu.memory_space<vmem>>, vector<2x3xf32>
    tpu.vector_store %arg4[%c10_281, %c0_282], %738 {strides = array<i32>} : memref<16x3xf32, #tpu.memory_space<vmem>>, vector<2x3xf32>,
    %c12_283 = arith.constant 12 : index
    %c0_284 = arith.constant 0 : index
    %740 = vector.load %arg3[%c12_283, %c0_284] : memref<16x3xf32, #tpu.memory_space<vmem>>, vector<2x3xf32>
    %741 = vector.extract_strided_slice %738 {offsets = [0, 0], sizes = [2, 1], strides = [1, 1]} : vector<2x3xf32> to vector<2x1xf32>
    %742 = vector.broadcast %741 : vector<2x1xf32> to vector<2x3xf32>
    %743 = arith.mulf %742, %640 : vector<2x3xf32>
    %744 = arith.addf %740, %743 : vector<2x3xf32>
    %745 = vector.extract_strided_slice %738 {offsets = [0, 1], sizes = [2, 1], strides = [1, 1]} : vector<2x3xf32> to vector<2x1xf32>
    %746 = vector.broadcast %745 : vector<2x1xf32> to vector<2x3xf32>
    %747 = arith.mulf %746, %644 : vector<2x3xf32>
    %748 = arith.addf %744, %747 : vector<2x3xf32>
    %749 = vector.extract_strided_slice %738 {offsets = [0, 2], sizes = [2, 1], strides = [1, 1]} : vector<2x3xf32> to vector<2x1xf32>
    %750 = vector.broadcast %749 : vector<2x1xf32> to vector<2x3xf32>
    %751 = arith.mulf %750, %648 : vector<2x3xf32>
    %752 = arith.addf %748, %751 : vector<2x3xf32>
    %753 = math.tanh %752 : vector<2x3xf32>
    %c12_285 = arith.constant 12 : index
    %c0_286 = arith.constant 0 : index
    %754 = vector.load %arg4[%c12_285, %c0_286] : memref<16x3xf32, #tpu.memory_space<vmem>>, vector<2x3xf32>
    tpu.vector_store %arg4[%c12_285, %c0_286], %753 {strides = array<i32>} : memref<16x3xf32, #tpu.memory_space<vmem>>, vector<2x3xf32>,
    %c14_287 = arith.constant 14 : index
    %c0_288 = arith.constant 0 : index
    %755 = vector.load %arg3[%c14_287, %c0_288] : memref<16x3xf32, #tpu.memory_space<vmem>>, vector<2x3xf32>
    %756 = vector.extract_strided_slice %753 {offsets = [0, 0], sizes = [2, 1], strides = [1, 1]} : vector<2x3xf32> to vector<2x1xf32>
    %757 = vector.broadcast %756 : vector<2x1xf32> to vector<2x3xf32>
    %758 = arith.mulf %757, %640 : vector<2x3xf32>
    %759 = arith.addf %755, %758 : vector<2x3xf32>
    %760 = vector.extract_strided_slice %753 {offsets = [0, 1], sizes = [2, 1], strides = [1, 1]} : vector<2x3xf32> to vector<2x1xf32>
    %761 = vector.broadcast %760 : vector<2x1xf32> to vector<2x3xf32>
    %762 = arith.mulf %761, %644 : vector<2x3xf32>
    %763 = arith.addf %759, %762 : vector<2x3xf32>
    %764 = vector.extract_strided_slice %753 {offsets = [0, 2], sizes = [2, 1], strides = [1, 1]} : vector<2x3xf32> to vector<2x1xf32>
    %765 = vector.broadcast %764 : vector<2x1xf32> to vector<2x3xf32>
    %766 = arith.mulf %765, %648 : vector<2x3xf32>
    %767 = arith.addf %763, %766 : vector<2x3xf32>
    %768 = math.tanh %767 : vector<2x3xf32>
    %c14_289 = arith.constant 14 : index
    %c0_290 = arith.constant 0 : index
    %769 = vector.load %arg4[%c14_289, %c0_290] : memref<16x3xf32, #tpu.memory_space<vmem>>, vector<2x3xf32>
    tpu.vector_store %arg4[%c14_289, %c0_290], %768 {strides = array<i32>} : memref<16x3xf32, #tpu.memory_space<vmem>>, vector<2x3xf32>,
    %c0_291 = arith.constant 0 : index
    %c0_292 = arith.constant 0 : index
    %770 = vector.load %arg4[%c0_291, %c0_292] : memref<16x3xf32, #tpu.memory_space<vmem>>, vector<16x3xf32>
    %771 = arith.truncf %770 : vector<16x3xf32> to vector<16x3xbf16>
    %772 = arith.truncf %624 : vector<3x2xf32> to vector<3x2xbf16>
    %cst_293 = arith.constant dense<0.000000e+00> : vector<16x2xf32>
    %773 = tpu.matmul %771, %772, %cst_293 {dimension_numbers = #tpu.dot_dimension_numbers<[1], [0], [0], [1], [0, 0, 1, 1], [], []>} : vector<16x3xbf16>, vector<3x2xbf16>, vector<16x2xf32> -> vector<16x2xf32>
    %774 = vector.broadcast %628 : vector<1x2xf32> to vector<16x2xf32>
    %775 = arith.addf %773, %774 : vector<16x2xf32>
    %c0_294 = arith.constant 0 : index
    %c0_295 = arith.constant 0 : index
    %776 = vector.load %arg2[%c0_294, %c0_295] : memref<16x2xf32, #tpu.memory_space<vmem>>, vector<16x2xf32>
    tpu.vector_store %arg2[%c0_294, %c0_295], %775 {strides = array<i32>} : memref<16x2xf32, #tpu.memory_space<vmem>>, vector<16x2xf32>,
    return
  }
}

</mosaic_0001>

<llo_original>
// kernel: decoder_feedforward_network.1
$region0: #{decoder_feedforward_network.1}
  #allocation0 [shape = 'u32[]', space=smem, size = 0x4, offset = 0x4, fixed_abs, tag = 'smem constant byte address 0x4 - core index']
  #allocation1 [shape = 'u32[144,128]{1,0:T(1,128)}', space=vmem, size = 0x12000, scoped, tag = 'internal scratch']
  #allocation2 [shape = 'f32[16,3]{1,0:T(8,128)}', space=vmem, size = 0x2000, scoped, tag = 'scratch operand']
  #allocation3 [shape = 'f32[16,3]{1,0:T(8,128)}', space=vmem, size = 0x2000, scoped, tag = 'scratch operand']
  %s0 = inlined_call_operand.vmem [shape: f32[16,2], index: 0, kind: input, shape index: {}]
  %s1 = inlined_call_operand.vmem [shape: f32[5,10,4], index: 1, kind: input, shape index: {}]
  %s2 = inlined_call_operand.vmem [shape: f32[16,2], index: 2, kind: output, shape index: {}]
  %s3 = sld [smem:[#allocation0]]
  $region18: #{decoder_feedforward_network.1} parent=0
    _
  %s5 = ssub.s32 1, %s3
  %s6 = scalar_select 0, %s5, %s3
  // Predicated region
  $region2: #{decoder_feedforward_network.1} parent=0 // pred_check
    _
  $region3: #{decoder_feedforward_network.1} parent=0 // pred_check_branch
    %8 = sbr.rel (0) target = $region5
  $region4: #{decoder_feedforward_network.1} parent=0 // pred_region
    _
  $region5: #{decoder_feedforward_network.1} parent=0 // pred_fallthru
    _
  // Predicated region
  $region6: #{decoder_feedforward_network.1} parent=0 // pred_check
    _
  $region7: #{decoder_feedforward_network.1} parent=0 // pred_check_branch
    %10 = sbr.rel (0) target = $region9
  $region8: #{decoder_feedforward_network.1} parent=0 // pred_region
    _
  $region9: #{decoder_feedforward_network.1} parent=0 // pred_fallthru
    _
  %v12 = vld [vmem:[%s0] sm:$0xff]
  %v13 = vld [vmem:[%s0 + $0x8] sm:$0xff]
  %v14 = vld [vmem:[%s1] sm:$0x3]
  %v15 = vld [vmem:[%s1 + $0x5] sm:$0x7]
  %v16 = vld [vmem:[%s1 + $0x8] sm:$0x1]
  %v17 = vld [vmem:[%s1 + $0x9] sm:$0x1]
  %v18 = vmax.f32 %v12, 0.0
  %v19 = vmax.f32 %v13, 0.0
  %v20 = vpack.c.bf16 %v19, %v18
  %v21 = vpack.c.bf16 %v14, %v14
  %v22 = vlaneseq
  %v23 = vshrl.u32 %v22, 7
  %v24 = vsub.s32 0, %v23
  %v25 = vrot.slane %v16, %v24
  %vm26 = vcmask 15360
  %v28 = vsel %vm26, %v20, 0
  %vm30 = vcmask 1040384
  %v32 = vsel %vm30, %v21, 0
  %34 = vmatprep.subr.bf16.mxu0 0
  %35 = vmatpush1.bf16.msra.mxu0 0
  %36 = vmatprep.subr.bf16.mxu0 0
  %37 = vmatpush1.bf16.msra.mxu0 0
  %38 = vmatprep.subr.bf16.mxu0 0
  %39 = vmatpush1.bf16.msra.mxu0 0
  %40 = vmatprep.subr.bf16.mxu0 0
  %41 = vmatpush1.bf16.msra.mxu0 0
  %42 = vmatprep.subr.bf16.mxu0 0
  %43 = vmatpush1.bf16.msra.mxu0 0
  %44 = vmatprep.subr.bf16.mxu0 0
  %45 = vmatpush1.bf16.msra.mxu0 0
  %46 = vmatprep.subr.bf16.mxu0 0
  %47 = vmatpush1.bf16.msra.mxu0 0
  %48 = vmatprep.subr.bf16.mxu0 0
  %49 = vmatpush1.bf16.msra.mxu0 %v32
  %50 = vmatprep.subr.bf16.mxu0 0
  %51 = vmatpush2.bf16.msra.mxu0 0
  %52 = vmatprep.subr.bf16.mxu0 0
  %53 = vmatpush2.bf16.msra.mxu0 0
  %54 = vmatprep.subr.bf16.mxu0 0
  %55 = vmatpush2.bf16.msra.mxu0 0
  %56 = vmatprep.subr.bf16.mxu0 0
  %57 = vmatpush2.bf16.msra.mxu0 0
  %58 = vmatprep.subr.bf16.mxu0 0
  %59 = vmatpush2.bf16.msra.mxu0 0
  %60 = vmatprep.subr.bf16.mxu0 0
  %61 = vmatpush2.bf16.msra.mxu0 0
  %62 = vmatprep.subr.bf16.mxu0 0
  %63 = vmatpush2.bf16.msra.mxu0 0
  %64 = vmatprep.subr.bf16.mxu0 0
  %65 = vmatpush2.bf16.msra.mxu0 0
  %66 = vmatprep.mubr.bf16.mxu0 0
  %67 = vmatmul.mubr.bf16.gmra.mxu0 %v28
  %v68 = vpop.f32.mrf.mxu0
  %v69 = vadd.f32 %v25, %v68
  %v70 = vpop.f32.mrf.mxu0
  %v71 = vpop.f32.mrf.mxu0
  %v72 = vadd.f32 %v25, %v71
  %v73 = vpop.f32.mrf.mxu0
  %74 = vdwg.mxu0
  %vm75 = vcmask 23552
  %76 = vst.msk [vmem:[#allocation2] sm:$0xff] %vm75, %v69
  %77 = vst.msk [vmem:[#allocation2 + $0x8] sm:$0xff] %vm75, %v72
  %v78 = vld [vmem:[%s1 + $0x2] sm:$0x1]
  %v79 = vlaneseq
  %v80 = vshrl.u32 %v79, 7
  %v81 = vsub.s32 0, %v80
  %v82 = vrot.slane %v78, %v81
  %v83 = vld [vmem:[%s1 + $0x3] sm:$0x1]
  %v84 = vlaneseq
  %v85 = vshrl.u32 %v84, 7
  %v86 = vsub.s32 0, %v85
  %v87 = vrot.slane %v83, %v86
  %v88 = vld [vmem:[%s1 + $0x4] sm:$0x1]
  %v89 = vlaneseq
  %v90 = vshrl.u32 %v89, 7
  %v91 = vsub.s32 0, %v90
  %v92 = vrot.slane %v88, %v91
  %v93 = vld [vmem:[#allocation2] sm:$0x3]
  %v94 = vmul.f32 %v82, 0.0
  %v95 = vadd.f32 %v93, %v94
  %v96 = vmul.f32 %v87, 0.0
  %v97 = vadd.f32 %v95, %v96
  %v98 = vmul.f32 %v92, 0.0
  %v99 = vadd.f32 %v97, %v98
  %v100 = vtanh.pop %v99
  %vm101 = vcmask 17408
  %102 = vst.msk [vmem:[#allocation3] sm:$0x3] %vm101, %v100
  %v103 = vld [vmem:[#allocation2 + $0x2] sm:$0x3]
  %105 = vset.pattern.permute.xlu0 0
  %106 = vperm.xlu0 %105, %v100
  %v107 = vpop.permute.xlu0 %106
  %v109 = vmul.f32 %v107, %v82
  %v110 = vadd.f32 %v103, %v109
  %111 = vset.pattern.permute.xlu0 1
  %112 = vperm.xlu0 %111, %v100
  %v113 = vpop.permute.xlu0 %112
  %v115 = vmul.f32 %v113, %v87
  %v116 = vadd.f32 %v110, %v115
  %117 = vset.pattern.permute.xlu0 2
  %118 = vperm.xlu0 %117, %v100
  %v119 = vpop.permute.xlu0 %118
  %v121 = vmul.f32 %v119, %v92
  %v122 = vadd.f32 %v116, %v121
  %v123 = vtanh.pop %v122
  %124 = vst.msk [vmem:[#allocation3 + $0x2] sm:$0x3] %vm101, %v123
  %v125 = vld [vmem:[#allocation2 + $0x4] sm:$0x3]
  %127 = vset.pattern.permute.xlu0 0
  %128 = vperm.xlu0 %127, %v123
  %v129 = vpop.permute.xlu0 %128
  %v131 = vmul.f32 %v129, %v82
  %v132 = vadd.f32 %v125, %v131
  %133 = vset.pattern.permute.xlu0 1
  %134 = vperm.xlu0 %133, %v123
  %v135 = vpop.permute.xlu0 %134
  %v137 = vmul.f32 %v135, %v87
  %v138 = vadd.f32 %v132, %v137
  %139 = vset.pattern.permute.xlu0 2
  %140 = vperm.xlu0 %139, %v123
  %v141 = vpop.permute.xlu0 %140
  %v143 = vmul.f32 %v141, %v92
  %v144 = vadd.f32 %v138, %v143
  %v145 = vtanh.pop %v144
  %146 = vst.msk [vmem:[#allocation3 + $0x4] sm:$0x3] %vm101, %v145
  %v147 = vld [vmem:[#allocation2 + $0x6] sm:$0x3]
  %149 = vset.pattern.permute.xlu0 0
  %150 = vperm.xlu0 %149, %v145
  %v151 = vpop.permute.xlu0 %150
  %v153 = vmul.f32 %v151, %v82
  %v154 = vadd.f32 %v147, %v153
  %155 = vset.pattern.permute.xlu0 1
  %156 = vperm.xlu0 %155, %v145
  %v157 = vpop.permute.xlu0 %156
  %v159 = vmul.f32 %v157, %v87
  %v160 = vadd.f32 %v154, %v159
  %161 = vset.pattern.permute.xlu0 2
  %162 = vperm.xlu0 %161, %v145
  %v163 = vpop.permute.xlu0 %162
  %v165 = vmul.f32 %v163, %v92
  %v166 = vadd.f32 %v160, %v165
  %v167 = vtanh.pop %v166
  %168 = vst.msk [vmem:[#allocation3 + $0x6] sm:$0x3] %vm101, %v167
  %v169 = vld [vmem:[#allocation2 + $0x8] sm:$0x3]
  %171 = vset.pattern.permute.xlu0 0
  %172 = vperm.xlu0 %171, %v167
  %v173 = vpop.permute.xlu0 %172
  %v175 = vmul.f32 %v173, %v82
  %v176 = vadd.f32 %v169, %v175
  %177 = vset.pattern.permute.xlu0 1
  %178 = vperm.xlu0 %177, %v167
  %v179 = vpop.permute.xlu0 %178
  %v181 = vmul.f32 %v179, %v87
  %v182 = vadd.f32 %v176, %v181
  %183 = vset.pattern.permute.xlu0 2
  %184 = vperm.xlu0 %183, %v167
  %v185 = vpop.permute.xlu0 %184
  %v187 = vmul.f32 %v185, %v92
  %v188 = vadd.f32 %v182, %v187
  %v189 = vtanh.pop %v188
  %190 = vst.msk [vmem:[#allocation3 + $0x8] sm:$0x3] %vm101, %v189
  %v191 = vld [vmem:[#allocation2 + $0xa] sm:$0x3]
  %193 = vset.pattern.permute.xlu0 0
  %194 = vperm.xlu0 %193, %v189
  %v195 = vpop.permute.xlu0 %194
  %v197 = vmul.f32 %v195, %v82
  %v198 = vadd.f32 %v191, %v197
  %199 = vset.pattern.permute.xlu0 1
  %200 = vperm.xlu0 %199, %v189
  %v201 = vpop.permute.xlu0 %200
  %v203 = vmul.f32 %v201, %v87
  %v204 = vadd.f32 %v198, %v203
  %205 = vset.pattern.permute.xlu0 2
  %206 = vperm.xlu0 %205, %v189
  %v207 = vpop.permute.xlu0 %206
  %v209 = vmul.f32 %v207, %v92
  %v210 = vadd.f32 %v204, %v209
  %v211 = vtanh.pop %v210
  %212 = vst.msk [vmem:[#allocation3 + $0xa] sm:$0x3] %vm101, %v211
  %v213 = vld [vmem:[#allocation2 + $0xc] sm:$0x3]
  %215 = vset.pattern.permute.xlu0 0
  %216 = vperm.xlu0 %215, %v211
  %v217 = vpop.permute.xlu0 %216
  %v219 = vmul.f32 %v217, %v82
  %v220 = vadd.f32 %v213, %v219
  %221 = vset.pattern.permute.xlu0 1
  %222 = vperm.xlu0 %221, %v211
  %v223 = vpop.permute.xlu0 %222
  %v225 = vmul.f32 %v223, %v87
  %v226 = vadd.f32 %v220, %v225
  %227 = vset.pattern.permute.xlu0 2
  %228 = vperm.xlu0 %227, %v211
  %v229 = vpop.permute.xlu0 %228
  %v231 = vmul.f32 %v229, %v92
  %v232 = vadd.f32 %v226, %v231
  %v233 = vtanh.pop %v232
  %234 = vst.msk [vmem:[#allocation3 + $0xc] sm:$0x3] %vm101, %v233
  %v235 = vld [vmem:[#allocation2 + $0xe] sm:$0x3]
  %237 = vset.pattern.permute.xlu0 0
  %238 = vperm.xlu0 %237, %v233
  %v239 = vpop.permute.xlu0 %238
  %v241 = vmul.f32 %v239, %v82
  %v242 = vadd.f32 %v235, %v241
  %243 = vset.pattern.permute.xlu0 1
  %244 = vperm.xlu0 %243, %v233
  %v245 = vpop.permute.xlu0 %244
  %v247 = vmul.f32 %v245, %v87
  %v248 = vadd.f32 %v242, %v247
  %249 = vset.pattern.permute.xlu0 2
  %250 = vperm.xlu0 %249, %v233
  %v251 = vpop.permute.xlu0 %250
  %v253 = vmul.f32 %v251, %v92
  %v254 = vadd.f32 %v248, %v253
  %v255 = vtanh.pop %v254
  %256 = vst.msk [vmem:[#allocation3 + $0xe] sm:$0x3] %vm101, %v255
  %v257 = vld [vmem:[#allocation3] sm:$0xff]
  %v258 = vld [vmem:[#allocation3 + $0x8] sm:$0xff]
  %v259 = vpack.c.bf16 %v258, %v257
  %v260 = vpack.c.bf16 %v15, %v15
  %v261 = vlaneseq
  %v262 = vshrl.u32 %v261, 7
  %v263 = vsub.s32 0, %v262
  %v264 = vrot.slane %v17, %v263
  %v266 = vsel %vm75, %v259, 0
  %vm268 = vcmask 1041408
  %v269 = vsel %vm30, 4294967295, 65535
  %v270 = vsel %vm268, %v269, 0
  %v272 = vand.u32 %v260, %v270
  %274 = vmatprep.subr.bf16.mxu0 0
  %275 = vmatpush1.bf16.msra.mxu0 0
  %276 = vmatprep.subr.bf16.mxu0 0
  %277 = vmatpush1.bf16.msra.mxu0 0
  %278 = vmatprep.subr.bf16.mxu0 0
  %279 = vmatpush1.bf16.msra.mxu0 0
  %280 = vmatprep.subr.bf16.mxu0 0
  %281 = vmatpush1.bf16.msra.mxu0 0
  %282 = vmatprep.subr.bf16.mxu0 0
  %283 = vmatpush1.bf16.msra.mxu0 0
  %284 = vmatprep.subr.bf16.mxu0 0
  %285 = vmatpush1.bf16.msra.mxu0 0
  %286 = vmatprep.subr.bf16.mxu0 0
  %287 = vmatpush1.bf16.msra.mxu0 0
  %288 = vmatprep.subr.bf16.mxu0 0
  %289 = vmatpush1.bf16.msra.mxu0 %v272
  %290 = vmatprep.subr.bf16.mxu0 0
  %291 = vmatpush2.bf16.msra.mxu0 0
  %292 = vmatprep.subr.bf16.mxu0 0
  %293 = vmatpush2.bf16.msra.mxu0 0
  %294 = vmatprep.subr.bf16.mxu0 0
  %295 = vmatpush2.bf16.msra.mxu0 0
  %296 = vmatprep.subr.bf16.mxu0 0
  %297 = vmatpush2.bf16.msra.mxu0 0
  %298 = vmatprep.subr.bf16.mxu0 0
  %299 = vmatpush2.bf16.msra.mxu0 0
  %300 = vmatprep.subr.bf16.mxu0 0
  %301 = vmatpush2.bf16.msra.mxu0 0
  %302 = vmatprep.subr.bf16.mxu0 0
  %303 = vmatpush2.bf16.msra.mxu0 0
  %304 = vmatprep.subr.bf16.mxu0 0
  %305 = vmatpush2.bf16.msra.mxu0 0
  %306 = vmatprep.mubr.bf16.mxu0 0
  %307 = vmatmul.mubr.bf16.gmra.mxu0 %v266
  %v308 = vpop.f32.mrf.mxu0
  %v309 = vadd.f32 %v264, %v308
  %v310 = vpop.f32.mrf.mxu0
  %v311 = vpop.f32.mrf.mxu0
  %v312 = vadd.f32 %v264, %v311
  %v313 = vpop.f32.mrf.mxu0
  %314 = vdwg.mxu0
  %s315 = scalar_lea.vmem %s1, 16
  %v316 = vld [vmem:[%s315] sm:$0x3]
  %v317 = vld [vmem:[%s315 + $0x5] sm:$0x7]
  %v318 = vld [vmem:[%s315 + $0x8] sm:$0x1]
  %v319 = vld [vmem:[%s315 + $0x9] sm:$0x1]
  %v320 = vmax.f32 %v309, 0.0
  %v321 = vmax.f32 %v312, 0.0
  %v322 = vpack.c.bf16 %v321, %v320
  %v323 = vpack.c.bf16 %v316, %v316
  %v324 = vlaneseq
  %v325 = vshrl.u32 %v324, 7
  %v326 = vsub.s32 0, %v325
  %v327 = vrot.slane %v318, %v326
  %v329 = vsel %vm26, %v322, 0
  %v332 = vsel %vm30, %v323, 0
  %334 = vmatprep.subr.bf16.mxu0 0
  %335 = vmatpush1.bf16.msra.mxu0 0
  %336 = vmatprep.subr.bf16.mxu0 0
  %337 = vmatpush1.bf16.msra.mxu0 0
  %338 = vmatprep.subr.bf16.mxu0 0
  %339 = vmatpush1.bf16.msra.mxu0 0
  %340 = vmatprep.subr.bf16.mxu0 0
  %341 = vmatpush1.bf16.msra.mxu0 0
  %342 = vmatprep.subr.bf16.mxu0 0
  %343 = vmatpush1.bf16.msra.mxu0 0
  %344 = vmatprep.subr.bf16.mxu0 0
  %345 = vmatpush1.bf16.msra.mxu0 0
  %346 = vmatprep.subr.bf16.mxu0 0
  %347 = vmatpush1.bf16.msra.mxu0 0
  %348 = vmatprep.subr.bf16.mxu0 0
  %349 = vmatpush1.bf16.msra.mxu0 %v332
  %350 = vmatprep.subr.bf16.mxu0 0
  %351 = vmatpush2.bf16.msra.mxu0 0
  %352 = vmatprep.subr.bf16.mxu0 0
  %353 = vmatpush2.bf16.msra.mxu0 0
  %354 = vmatprep.subr.bf16.mxu0 0
  %355 = vmatpush2.bf16.msra.mxu0 0
  %356 = vmatprep.subr.bf16.mxu0 0
  %357 = vmatpush2.bf16.msra.mxu0 0
  %358 = vmatprep.subr.bf16.mxu0 0
  %359 = vmatpush2.bf16.msra.mxu0 0
  %360 = vmatprep.subr.bf16.mxu0 0
  %361 = vmatpush2.bf16.msra.mxu0 0
  %362 = vmatprep.subr.bf16.mxu0 0
  %363 = vmatpush2.bf16.msra.mxu0 0
  %364 = vmatprep.subr.bf16.mxu0 0
  %365 = vmatpush2.bf16.msra.mxu0 0
  %366 = vmatprep.mubr.bf16.mxu0 0
  %367 = vmatmul.mubr.bf16.gmra.mxu0 %v329
  %v368 = vpop.f32.mrf.mxu0
  %v369 = vadd.f32 %v327, %v368
  %v370 = vpop.f32.mrf.mxu0
  %v371 = vpop.f32.mrf.mxu0
  %v372 = vadd.f32 %v327, %v371
  %v373 = vpop.f32.mrf.mxu0
  %374 = vdwg.mxu0
  %375 = vst.msk [vmem:[#allocation2] sm:$0xff] %vm75, %v369
  %376 = vst.msk [vmem:[#allocation2 + $0x8] sm:$0xff] %vm75, %v372
  %v377 = vld [vmem:[%s315 + $0x2] sm:$0x1]
  %v378 = vlaneseq
  %v379 = vshrl.u32 %v378, 7
  %v380 = vsub.s32 0, %v379
  %v381 = vrot.slane %v377, %v380
  %v382 = vld [vmem:[%s315 + $0x3] sm:$0x1]
  %v383 = vlaneseq
  %v384 = vshrl.u32 %v383, 7
  %v385 = vsub.s32 0, %v384
  %v386 = vrot.slane %v382, %v385
  %v387 = vld [vmem:[%s315 + $0x4] sm:$0x1]
  %v388 = vlaneseq
  %v389 = vshrl.u32 %v388, 7
  %v390 = vsub.s32 0, %v389
  %v391 = vrot.slane %v387, %v390
  %v392 = vld [vmem:[#allocation2] sm:$0x3]
  %v393 = vmul.f32 %v381, 0.0
  %v394 = vadd.f32 %v392, %v393
  %v395 = vmul.f32 %v386, 0.0
  %v396 = vadd.f32 %v394, %v395
  %v397 = vmul.f32 %v391, 0.0
  %v398 = vadd.f32 %v396, %v397
  %v399 = vtanh.pop %v398
  %400 = vst.msk [vmem:[#allocation3] sm:$0x3] %vm101, %v399
  %v401 = vld [vmem:[#allocation2 + $0x2] sm:$0x3]
  %403 = vset.pattern.permute.xlu0 0
  %404 = vperm.xlu0 %403, %v399
  %v405 = vpop.permute.xlu0 %404
  %v407 = vmul.f32 %v405, %v381
  %v408 = vadd.f32 %v401, %v407
  %409 = vset.pattern.permute.xlu0 1
  %410 = vperm.xlu0 %409, %v399
  %v411 = vpop.permute.xlu0 %410
  %v413 = vmul.f32 %v411, %v386
  %v414 = vadd.f32 %v408, %v413
  %415 = vset.pattern.permute.xlu0 2
  %416 = vperm.xlu0 %415, %v399
  %v417 = vpop.permute.xlu0 %416
  %v419 = vmul.f32 %v417, %v391
  %v420 = vadd.f32 %v414, %v419
  %v421 = vtanh.pop %v420
  %422 = vst.msk [vmem:[#allocation3 + $0x2] sm:$0x3] %vm101, %v421
  %v423 = vld [vmem:[#allocation2 + $0x4] sm:$0x3]
  %425 = vset.pattern.permute.xlu0 0
  %426 = vperm.xlu0 %425, %v421
  %v427 = vpop.permute.xlu0 %426
  %v429 = vmul.f32 %v427, %v381
  %v430 = vadd.f32 %v423, %v429
  %431 = vset.pattern.permute.xlu0 1
  %432 = vperm.xlu0 %431, %v421
  %v433 = vpop.permute.xlu0 %432
  %v435 = vmul.f32 %v433, %v386
  %v436 = vadd.f32 %v430, %v435
  %437 = vset.pattern.permute.xlu0 2
  %438 = vperm.xlu0 %437, %v421
  %v439 = vpop.permute.xlu0 %438
  %v441 = vmul.f32 %v439, %v391
  %v442 = vadd.f32 %v436, %v441
  %v443 = vtanh.pop %v442
  %444 = vst.msk [vmem:[#allocation3 + $0x4] sm:$0x3] %vm101, %v443
  %v445 = vld [vmem:[#allocation2 + $0x6] sm:$0x3]
  %447 = vset.pattern.permute.xlu0 0
  %448 = vperm.xlu0 %447, %v443
  %v449 = vpop.permute.xlu0 %448
  %v451 = vmul.f32 %v449, %v381
  %v452 = vadd.f32 %v445, %v451
  %453 = vset.pattern.permute.xlu0 1
  %454 = vperm.xlu0 %453, %v443
  %v455 = vpop.permute.xlu0 %454
  %v457 = vmul.f32 %v455, %v386
  %v458 = vadd.f32 %v452, %v457
  %459 = vset.pattern.permute.xlu0 2
  %460 = vperm.xlu0 %459, %v443
  %v461 = vpop.permute.xlu0 %460
  %v463 = vmul.f32 %v461, %v391
  %v464 = vadd.f32 %v458, %v463
  %v465 = vtanh.pop %v464
  %466 = vst.msk [vmem:[#allocation3 + $0x6] sm:$0x3] %vm101, %v465
  %v467 = vld [vmem:[#allocation2 + $0x8] sm:$0x3]
  %469 = vset.pattern.permute.xlu0 0
  %470 = vperm.xlu0 %469, %v465
  %v471 = vpop.permute.xlu0 %470
  %v473 = vmul.f32 %v471, %v381
  %v474 = vadd.f32 %v467, %v473
  %475 = vset.pattern.permute.xlu0 1
  %476 = vperm.xlu0 %475, %v465
  %v477 = vpop.permute.xlu0 %476
  %v479 = vmul.f32 %v477, %v386
  %v480 = vadd.f32 %v474, %v479
  %481 = vset.pattern.permute.xlu0 2
  %482 = vperm.xlu0 %481, %v465
  %v483 = vpop.permute.xlu0 %482
  %v485 = vmul.f32 %v483, %v391
  %v486 = vadd.f32 %v480, %v485
  %v487 = vtanh.pop %v486
  %488 = vst.msk [vmem:[#allocation3 + $0x8] sm:$0x3] %vm101, %v487
  %v489 = vld [vmem:[#allocation2 + $0xa] sm:$0x3]
  %491 = vset.pattern.permute.xlu0 0
  %492 = vperm.xlu0 %491, %v487
  %v493 = vpop.permute.xlu0 %492
  %v495 = vmul.f32 %v493, %v381
  %v496 = vadd.f32 %v489, %v495
  %497 = vset.pattern.permute.xlu0 1
  %498 = vperm.xlu0 %497, %v487
  %v499 = vpop.permute.xlu0 %498
  %v501 = vmul.f32 %v499, %v386
  %v502 = vadd.f32 %v496, %v501
  %503 = vset.pattern.permute.xlu0 2
  %504 = vperm.xlu0 %503, %v487
  %v505 = vpop.permute.xlu0 %504
  %v507 = vmul.f32 %v505, %v391
  %v508 = vadd.f32 %v502, %v507
  %v509 = vtanh.pop %v508
  %510 = vst.msk [vmem:[#allocation3 + $0xa] sm:$0x3] %vm101, %v509
  %v511 = vld [vmem:[#allocation2 + $0xc] sm:$0x3]
  %513 = vset.pattern.permute.xlu0 0
  %514 = vperm.xlu0 %513, %v509
  %v515 = vpop.permute.xlu0 %514
  %v517 = vmul.f32 %v515, %v381
  %v518 = vadd.f32 %v511, %v517
  %519 = vset.pattern.permute.xlu0 1
  %520 = vperm.xlu0 %519, %v509
  %v521 = vpop.permute.xlu0 %520
  %v523 = vmul.f32 %v521, %v386
  %v524 = vadd.f32 %v518, %v523
  %525 = vset.pattern.permute.xlu0 2
  %526 = vperm.xlu0 %525, %v509
  %v527 = vpop.permute.xlu0 %526
  %v529 = vmul.f32 %v527, %v391
  %v530 = vadd.f32 %v524, %v529
  %v531 = vtanh.pop %v530
  %532 = vst.msk [vmem:[#allocation3 + $0xc] sm:$0x3] %vm101, %v531
  %v533 = vld [vmem:[#allocation2 + $0xe] sm:$0x3]
  %535 = vset.pattern.permute.xlu0 0
  %536 = vperm.xlu0 %535, %v531
  %v537 = vpop.permute.xlu0 %536
  %v539 = vmul.f32 %v537, %v381
  %v540 = vadd.f32 %v533, %v539
  %541 = vset.pattern.permute.xlu0 1
  %542 = vperm.xlu0 %541, %v531
  %v543 = vpop.permute.xlu0 %542
  %v545 = vmul.f32 %v543, %v386
  %v546 = vadd.f32 %v540, %v545
  %547 = vset.pattern.permute.xlu0 2
  %548 = vperm.xlu0 %547, %v531
  %v549 = vpop.permute.xlu0 %548
  %v551 = vmul.f32 %v549, %v391
  %v552 = vadd.f32 %v546, %v551
  %v553 = vtanh.pop %v552
  %554 = vst.msk [vmem:[#allocation3 + $0xe] sm:$0x3] %vm101, %v553
  %v555 = vld [vmem:[#allocation3] sm:$0xff]
  %v556 = vld [vmem:[#allocation3 + $0x8] sm:$0xff]
  %v557 = vpack.c.bf16 %v556, %v555
  %v558 = vpack.c.bf16 %v317, %v317
  %v559 = vlaneseq
  %v560 = vshrl.u32 %v559, 7
  %v561 = vsub.s32 0, %v560
  %v562 = vrot.slane %v319, %v561
  %v564 = vsel %vm75, %v557, 0
  %v567 = vand.u32 %v558, %v270
  %569 = vmatprep.subr.bf16.mxu0 0
  %570 = vmatpush1.bf16.msra.mxu0 0
  %571 = vmatprep.subr.bf16.mxu0 0
  %572 = vmatpush1.bf16.msra.mxu0 0
  %573 = vmatprep.subr.bf16.mxu0 0
  %574 = vmatpush1.bf16.msra.mxu0 0
  %575 = vmatprep.subr.bf16.mxu0 0
  %576 = vmatpush1.bf16.msra.mxu0 0
  %577 = vmatprep.subr.bf16.mxu0 0
  %578 = vmatpush1.bf16.msra.mxu0 0
  %579 = vmatprep.subr.bf16.mxu0 0
  %580 = vmatpush1.bf16.msra.mxu0 0
  %581 = vmatprep.subr.bf16.mxu0 0
  %582 = vmatpush1.bf16.msra.mxu0 0
  %583 = vmatprep.subr.bf16.mxu0 0
  %584 = vmatpush1.bf16.msra.mxu0 %v567
  %585 = vmatprep.subr.bf16.mxu0 0
  %586 = vmatpush2.bf16.msra.mxu0 0
  %587 = vmatprep.subr.bf16.mxu0 0
  %588 = vmatpush2.bf16.msra.mxu0 0
  %589 = vmatprep.subr.bf16.mxu0 0
  %590 = vmatpush2.bf16.msra.mxu0 0
  %591 = vmatprep.subr.bf16.mxu0 0
  %592 = vmatpush2.bf16.msra.mxu0 0
  %593 = vmatprep.subr.bf16.mxu0 0
  %594 = vmatpush2.bf16.msra.mxu0 0
  %595 = vmatprep.subr.bf16.mxu0 0
  %596 = vmatpush2.bf16.msra.mxu0 0
  %597 = vmatprep.subr.bf16.mxu0 0
  %598 = vmatpush2.bf16.msra.mxu0 0
  %599 = vmatprep.subr.bf16.mxu0 0
  %600 = vmatpush2.bf16.msra.mxu0 0
  %601 = vmatprep.mubr.bf16.mxu0 0
  %602 = vmatmul.mubr.bf16.gmra.mxu0 %v564
  %v603 = vpop.f32.mrf.mxu0
  %v604 = vadd.f32 %v562, %v603
  %v605 = vpop.f32.mrf.mxu0
  %v606 = vpop.f32.mrf.mxu0
  %v607 = vadd.f32 %v562, %v606
  %v608 = vpop.f32.mrf.mxu0
  %609 = vdwg.mxu0
  %s610 = scalar_lea.vmem %s1, 32
  %v611 = vld [vmem:[%s610] sm:$0x3]
  %v612 = vld [vmem:[%s610 + $0x5] sm:$0x7]
  %v613 = vld [vmem:[%s610 + $0x8] sm:$0x1]
  %v614 = vld [vmem:[%s610 + $0x9] sm:$0x1]
  %v615 = vmax.f32 %v604, 0.0
  %v616 = vmax.f32 %v607, 0.0
  %v617 = vpack.c.bf16 %v616, %v615
  %v618 = vpack.c.bf16 %v611, %v611
  %v619 = vlaneseq
  %v620 = vshrl.u32 %v619, 7
  %v621 = vsub.s32 0, %v620
  %v622 = vrot.slane %v613, %v621
  %v624 = vsel %vm26, %v617, 0
  %v627 = vsel %vm30, %v618, 0
  %629 = vmatprep.subr.bf16.mxu0 0
  %630 = vmatpush1.bf16.msra.mxu0 0
  %631 = vmatprep.subr.bf16.mxu0 0
  %632 = vmatpush1.bf16.msra.mxu0 0
  %633 = vmatprep.subr.bf16.mxu0 0
  %634 = vmatpush1.bf16.msra.mxu0 0
  %635 = vmatprep.subr.bf16.mxu0 0
  %636 = vmatpush1.bf16.msra.mxu0 0
  %637 = vmatprep.subr.bf16.mxu0 0
  %638 = vmatpush1.bf16.msra.mxu0 0
  %639 = vmatprep.subr.bf16.mxu0 0
  %640 = vmatpush1.bf16.msra.mxu0 0
  %641 = vmatprep.subr.bf16.mxu0 0
  %642 = vmatpush1.bf16.msra.mxu0 0
  %643 = vmatprep.subr.bf16.mxu0 0
  %644 = vmatpush1.bf16.msra.mxu0 %v627
  %645 = vmatprep.subr.bf16.mxu0 0
  %646 = vmatpush2.bf16.msra.mxu0 0
  %647 = vmatprep.subr.bf16.mxu0 0
  %648 = vmatpush2.bf16.msra.mxu0 0
  %649 = vmatprep.subr.bf16.mxu0 0
  %650 = vmatpush2.bf16.msra.mxu0 0
  %651 = vmatprep.subr.bf16.mxu0 0
  %652 = vmatpush2.bf16.msra.mxu0 0
  %653 = vmatprep.subr.bf16.mxu0 0
  %654 = vmatpush2.bf16.msra.mxu0 0
  %655 = vmatprep.subr.bf16.mxu0 0
  %656 = vmatpush2.bf16.msra.mxu0 0
  %657 = vmatprep.subr.bf16.mxu0 0
  %658 = vmatpush2.bf16.msra.mxu0 0
  %659 = vmatprep.subr.bf16.mxu0 0
  %660 = vmatpush2.bf16.msra.mxu0 0
  %661 = vmatprep.mubr.bf16.mxu0 0
  %662 = vmatmul.mubr.bf16.gmra.mxu0 %v624
  %v663 = vpop.f32.mrf.mxu0
  %v664 = vadd.f32 %v622, %v663
  %v665 = vpop.f32.mrf.mxu0
  %v666 = vpop.f32.mrf.mxu0
  %v667 = vadd.f32 %v622, %v666
  %v668 = vpop.f32.mrf.mxu0
  %669 = vdwg.mxu0
  %670 = vst.msk [vmem:[#allocation2] sm:$0xff] %vm75, %v664
  %671 = vst.msk [vmem:[#allocation2 + $0x8] sm:$0xff] %vm75, %v667
  %v672 = vld [vmem:[%s610 + $0x2] sm:$0x1]
  %v673 = vlaneseq
  %v674 = vshrl.u32 %v673, 7
  %v675 = vsub.s32 0, %v674
  %v676 = vrot.slane %v672, %v675
  %v677 = vld [vmem:[%s610 + $0x3] sm:$0x1]
  %v678 = vlaneseq
  %v679 = vshrl.u32 %v678, 7
  %v680 = vsub.s32 0, %v679
  %v681 = vrot.slane %v677, %v680
  %v682 = vld [vmem:[%s610 + $0x4] sm:$0x1]
  %v683 = vlaneseq
  %v684 = vshrl.u32 %v683, 7
  %v685 = vsub.s32 0, %v684
  %v686 = vrot.slane %v682, %v685
  %v687 = vld [vmem:[#allocation2] sm:$0x3]
  %v688 = vmul.f32 %v676, 0.0
  %v689 = vadd.f32 %v687, %v688
  %v690 = vmul.f32 %v681, 0.0
  %v691 = vadd.f32 %v689, %v690
  %v692 = vmul.f32 %v686, 0.0
  %v693 = vadd.f32 %v691, %v692
  %v694 = vtanh.pop %v693
  %695 = vst.msk [vmem:[#allocation3] sm:$0x3] %vm101, %v694
  %v696 = vld [vmem:[#allocation2 + $0x2] sm:$0x3]
  %698 = vset.pattern.permute.xlu0 0
  %699 = vperm.xlu0 %698, %v694
  %v700 = vpop.permute.xlu0 %699
  %v702 = vmul.f32 %v700, %v676
  %v703 = vadd.f32 %v696, %v702
  %704 = vset.pattern.permute.xlu0 1
  %705 = vperm.xlu0 %704, %v694
  %v706 = vpop.permute.xlu0 %705
  %v708 = vmul.f32 %v706, %v681
  %v709 = vadd.f32 %v703, %v708
  %710 = vset.pattern.permute.xlu0 2
  %711 = vperm.xlu0 %710, %v694
  %v712 = vpop.permute.xlu0 %711
  %v714 = vmul.f32 %v712, %v686
  %v715 = vadd.f32 %v709, %v714
  %v716 = vtanh.pop %v715
  %717 = vst.msk [vmem:[#allocation3 + $0x2] sm:$0x3] %vm101, %v716
  %v718 = vld [vmem:[#allocation2 + $0x4] sm:$0x3]
  %720 = vset.pattern.permute.xlu0 0
  %721 = vperm.xlu0 %720, %v716
  %v722 = vpop.permute.xlu0 %721
  %v724 = vmul.f32 %v722, %v676
  %v725 = vadd.f32 %v718, %v724
  %726 = vset.pattern.permute.xlu0 1
  %727 = vperm.xlu0 %726, %v716
  %v728 = vpop.permute.xlu0 %727
  %v730 = vmul.f32 %v728, %v681
  %v731 = vadd.f32 %v725, %v730
  %732 = vset.pattern.permute.xlu0 2
  %733 = vperm.xlu0 %732, %v716
  %v734 = vpop.permute.xlu0 %733
  %v736 = vmul.f32 %v734, %v686
  %v737 = vadd.f32 %v731, %v736
  %v738 = vtanh.pop %v737
  %739 = vst.msk [vmem:[#allocation3 + $0x4] sm:$0x3] %vm101, %v738
  %v740 = vld [vmem:[#allocation2 + $0x6] sm:$0x3]
  %742 = vset.pattern.permute.xlu0 0
  %743 = vperm.xlu0 %742, %v738
  %v744 = vpop.permute.xlu0 %743
  %v746 = vmul.f32 %v744, %v676
  %v747 = vadd.f32 %v740, %v746
  %748 = vset.pattern.permute.xlu0 1
  %749 = vperm.xlu0 %748, %v738
  %v750 = vpop.permute.xlu0 %749
  %v752 = vmul.f32 %v750, %v681
  %v753 = vadd.f32 %v747, %v752
  %754 = vset.pattern.permute.xlu0 2
  %755 = vperm.xlu0 %754, %v738
  %v756 = vpop.permute.xlu0 %755
  %v758 = vmul.f32 %v756, %v686
  %v759 = vadd.f32 %v753, %v758
  %v760 = vtanh.pop %v759
  %761 = vst.msk [vmem:[#allocation3 + $0x6] sm:$0x3] %vm101, %v760
  %v762 = vld [vmem:[#allocation2 + $0x8] sm:$0x3]
  %764 = vset.pattern.permute.xlu0 0
  %765 = vperm.xlu0 %764, %v760
  %v766 = vpop.permute.xlu0 %765
  %v768 = vmul.f32 %v766, %v676
  %v769 = vadd.f32 %v762, %v768
  %770 = vset.pattern.permute.xlu0 1
  %771 = vperm.xlu0 %770, %v760
  %v772 = vpop.permute.xlu0 %771
  %v774 = vmul.f32 %v772, %v681
  %v775 = vadd.f32 %v769, %v774
  %776 = vset.pattern.permute.xlu0 2
  %777 = vperm.xlu0 %776, %v760
  %v778 = vpop.permute.xlu0 %777
  %v780 = vmul.f32 %v778, %v686
  %v781 = vadd.f32 %v775, %v780
  %v782 = vtanh.pop %v781
  %783 = vst.msk [vmem:[#allocation3 + $0x8] sm:$0x3] %vm101, %v782
  %v784 = vld [vmem:[#allocation2 + $0xa] sm:$0x3]
  %786 = vset.pattern.permute.xlu0 0
  %787 = vperm.xlu0 %786, %v782
  %v788 = vpop.permute.xlu0 %787
  %v790 = vmul.f32 %v788, %v676
  %v791 = vadd.f32 %v784, %v790
  %792 = vset.pattern.permute.xlu0 1
  %793 = vperm.xlu0 %792, %v782
  %v794 = vpop.permute.xlu0 %793
  %v796 = vmul.f32 %v794, %v681
  %v797 = vadd.f32 %v791, %v796
  %798 = vset.pattern.permute.xlu0 2
  %799 = vperm.xlu0 %798, %v782
  %v800 = vpop.permute.xlu0 %799
  %v802 = vmul.f32 %v800, %v686
  %v803 = vadd.f32 %v797, %v802
  %v804 = vtanh.pop %v803
  %805 = vst.msk [vmem:[#allocation3 + $0xa] sm:$0x3] %vm101, %v804
  %v806 = vld [vmem:[#allocation2 + $0xc] sm:$0x3]
  %808 = vset.pattern.permute.xlu0 0
  %809 = vperm.xlu0 %808, %v804
  %v810 = vpop.permute.xlu0 %809
  %v812 = vmul.f32 %v810, %v676
  %v813 = vadd.f32 %v806, %v812
  %814 = vset.pattern.permute.xlu0 1
  %815 = vperm.xlu0 %814, %v804
  %v816 = vpop.permute.xlu0 %815
  %v818 = vmul.f32 %v816, %v681
  %v819 = vadd.f32 %v813, %v818
  %820 = vset.pattern.permute.xlu0 2
  %821 = vperm.xlu0 %820, %v804
  %v822 = vpop.permute.xlu0 %821
  %v824 = vmul.f32 %v822, %v686
  %v825 = vadd.f32 %v819, %v824
  %v826 = vtanh.pop %v825
  %827 = vst.msk [vmem:[#allocation3 + $0xc] sm:$0x3] %vm101, %v826
  %v828 = vld [vmem:[#allocation2 + $0xe] sm:$0x3]
  %830 = vset.pattern.permute.xlu0 0
  %831 = vperm.xlu0 %830, %v826
  %v832 = vpop.permute.xlu0 %831
  %v834 = vmul.f32 %v832, %v676
  %v835 = vadd.f32 %v828, %v834
  %836 = vset.pattern.permute.xlu0 1
  %837 = vperm.xlu0 %836, %v826
  %v838 = vpop.permute.xlu0 %837
  %v840 = vmul.f32 %v838, %v681
  %v841 = vadd.f32 %v835, %v840
  %842 = vset.pattern.permute.xlu0 2
  %843 = vperm.xlu0 %842, %v826
  %v844 = vpop.permute.xlu0 %843
  %v846 = vmul.f32 %v844, %v686
  %v847 = vadd.f32 %v841, %v846
  %v848 = vtanh.pop %v847
  %849 = vst.msk [vmem:[#allocation3 + $0xe] sm:$0x3] %vm101, %v848
  %v850 = vld [vmem:[#allocation3] sm:$0xff]
  %v851 = vld [vmem:[#allocation3 + $0x8] sm:$0xff]
  %v852 = vpack.c.bf16 %v851, %v850
  %v853 = vpack.c.bf16 %v612, %v612
  %v854 = vlaneseq
  %v855 = vshrl.u32 %v854, 7
  %v856 = vsub.s32 0, %v855
  %v857 = vrot.slane %v614, %v856
  %v859 = vsel %vm75, %v852, 0
  %v862 = vand.u32 %v853, %v270
  %864 = vmatprep.subr.bf16.mxu0 0
  %865 = vmatpush1.bf16.msra.mxu0 0
  %866 = vmatprep.subr.bf16.mxu0 0
  %867 = vmatpush1.bf16.msra.mxu0 0
  %868 = vmatprep.subr.bf16.mxu0 0
  %869 = vmatpush1.bf16.msra.mxu0 0
  %870 = vmatprep.subr.bf16.mxu0 0
  %871 = vmatpush1.bf16.msra.mxu0 0
  %872 = vmatprep.subr.bf16.mxu0 0
  %873 = vmatpush1.bf16.msra.mxu0 0
  %874 = vmatprep.subr.bf16.mxu0 0
  %875 = vmatpush1.bf16.msra.mxu0 0
  %876 = vmatprep.subr.bf16.mxu0 0
  %877 = vmatpush1.bf16.msra.mxu0 0
  %878 = vmatprep.subr.bf16.mxu0 0
  %879 = vmatpush1.bf16.msra.mxu0 %v862
  %880 = vmatprep.subr.bf16.mxu0 0
  %881 = vmatpush2.bf16.msra.mxu0 0
  %882 = vmatprep.subr.bf16.mxu0 0
  %883 = vmatpush2.bf16.msra.mxu0 0
  %884 = vmatprep.subr.bf16.mxu0 0
  %885 = vmatpush2.bf16.msra.mxu0 0
  %886 = vmatprep.subr.bf16.mxu0 0
  %887 = vmatpush2.bf16.msra.mxu0 0
  %888 = vmatprep.subr.bf16.mxu0 0
  %889 = vmatpush2.bf16.msra.mxu0 0
  %890 = vmatprep.subr.bf16.mxu0 0
  %891 = vmatpush2.bf16.msra.mxu0 0
  %892 = vmatprep.subr.bf16.mxu0 0
  %893 = vmatpush2.bf16.msra.mxu0 0
  %894 = vmatprep.subr.bf16.mxu0 0
  %895 = vmatpush2.bf16.msra.mxu0 0
  %896 = vmatprep.mubr.bf16.mxu0 0
  %897 = vmatmul.mubr.bf16.gmra.mxu0 %v859
  %v898 = vpop.f32.mrf.mxu0
  %v899 = vadd.f32 %v857, %v898
  %v900 = vpop.f32.mrf.mxu0
  %v901 = vpop.f32.mrf.mxu0
  %v902 = vadd.f32 %v857, %v901
  %v903 = vpop.f32.mrf.mxu0
  %904 = vdwg.mxu0
  %s905 = scalar_lea.vmem %s1, 48
  %v906 = vld [vmem:[%s905] sm:$0x3]
  %v907 = vld [vmem:[%s905 + $0x5] sm:$0x7]
  %v908 = vld [vmem:[%s905 + $0x8] sm:$0x1]
  %v909 = vld [vmem:[%s905 + $0x9] sm:$0x1]
  %v910 = vmax.f32 %v899, 0.0
  %v911 = vmax.f32 %v902, 0.0
  %v912 = vpack.c.bf16 %v911, %v910
  %v913 = vpack.c.bf16 %v906, %v906
  %v914 = vlaneseq
  %v915 = vshrl.u32 %v914, 7
  %v916 = vsub.s32 0, %v915
  %v917 = vrot.slane %v908, %v916
  %v919 = vsel %vm26, %v912, 0
  %v922 = vsel %vm30, %v913, 0
  %924 = vmatprep.subr.bf16.mxu0 0
  %925 = vmatpush1.bf16.msra.mxu0 0
  %926 = vmatprep.subr.bf16.mxu0 0
  %927 = vmatpush1.bf16.msra.mxu0 0
  %928 = vmatprep.subr.bf16.mxu0 0
  %929 = vmatpush1.bf16.msra.mxu0 0
  %930 = vmatprep.subr.bf16.mxu0 0
  %931 = vmatpush1.bf16.msra.mxu0 0
  %932 = vmatprep.subr.bf16.mxu0 0
  %933 = vmatpush1.bf16.msra.mxu0 0
  %934 = vmatprep.subr.bf16.mxu0 0
  %935 = vmatpush1.bf16.msra.mxu0 0
  %936 = vmatprep.subr.bf16.mxu0 0
  %937 = vmatpush1.bf16.msra.mxu0 0
  %938 = vmatprep.subr.bf16.mxu0 0
  %939 = vmatpush1.bf16.msra.mxu0 %v922
  %940 = vmatprep.subr.bf16.mxu0 0
  %941 = vmatpush2.bf16.msra.mxu0 0
  %942 = vmatprep.subr.bf16.mxu0 0
  %943 = vmatpush2.bf16.msra.mxu0 0
  %944 = vmatprep.subr.bf16.mxu0 0
  %945 = vmatpush2.bf16.msra.mxu0 0
  %946 = vmatprep.subr.bf16.mxu0 0
  %947 = vmatpush2.bf16.msra.mxu0 0
  %948 = vmatprep.subr.bf16.mxu0 0
  %949 = vmatpush2.bf16.msra.mxu0 0
  %950 = vmatprep.subr.bf16.mxu0 0
  %951 = vmatpush2.bf16.msra.mxu0 0
  %952 = vmatprep.subr.bf16.mxu0 0
  %953 = vmatpush2.bf16.msra.mxu0 0
  %954 = vmatprep.subr.bf16.mxu0 0
  %955 = vmatpush2.bf16.msra.mxu0 0
  %956 = vmatprep.mubr.bf16.mxu0 0
  %957 = vmatmul.mubr.bf16.gmra.mxu0 %v919
  %v958 = vpop.f32.mrf.mxu0
  %v959 = vadd.f32 %v917, %v958
  %v960 = vpop.f32.mrf.mxu0
  %v961 = vpop.f32.mrf.mxu0
  %v962 = vadd.f32 %v917, %v961
  %v963 = vpop.f32.mrf.mxu0
  %964 = vdwg.mxu0
  %965 = vst.msk [vmem:[#allocation2] sm:$0xff] %vm75, %v959
  %966 = vst.msk [vmem:[#allocation2 + $0x8] sm:$0xff] %vm75, %v962
  %v967 = vld [vmem:[%s905 + $0x2] sm:$0x1]
  %v968 = vlaneseq
  %v969 = vshrl.u32 %v968, 7
  %v970 = vsub.s32 0, %v969
  %v971 = vrot.slane %v967, %v970
  %v972 = vld [vmem:[%s905 + $0x3] sm:$0x1]
  %v973 = vlaneseq
  %v974 = vshrl.u32 %v973, 7
  %v975 = vsub.s32 0, %v974
  %v976 = vrot.slane %v972, %v975
  %v977 = vld [vmem:[%s905 + $0x4] sm:$0x1]
  %v978 = vlaneseq
  %v979 = vshrl.u32 %v978, 7
  %v980 = vsub.s32 0, %v979
  %v981 = vrot.slane %v977, %v980
  %v982 = vld [vmem:[#allocation2] sm:$0x3]
  %v983 = vmul.f32 %v971, 0.0
  %v984 = vadd.f32 %v982, %v983
  %v985 = vmul.f32 %v976, 0.0
  %v986 = vadd.f32 %v984, %v985
  %v987 = vmul.f32 %v981, 0.0
  %v988 = vadd.f32 %v986, %v987
  %v989 = vtanh.pop %v988
  %990 = vst.msk [vmem:[#allocation3] sm:$0x3] %vm101, %v989
  %v991 = vld [vmem:[#allocation2 + $0x2] sm:$0x3]
  %993 = vset.pattern.permute.xlu0 0
  %994 = vperm.xlu0 %993, %v989
  %v995 = vpop.permute.xlu0 %994
  %v997 = vmul.f32 %v995, %v971
  %v998 = vadd.f32 %v991, %v997
  %999 = vset.pattern.permute.xlu0 1
  %1000 = vperm.xlu0 %999, %v989
  %v1001 = vpop.permute.xlu0 %1000
  %v1003 = vmul.f32 %v1001, %v976
  %v1004 = vadd.f32 %v998, %v1003
  %1005 = vset.pattern.permute.xlu0 2
  %1006 = vperm.xlu0 %1005, %v989
  %v1007 = vpop.permute.xlu0 %1006
  %v1009 = vmul.f32 %v1007, %v981
  %v1010 = vadd.f32 %v1004, %v1009
  %v1011 = vtanh.pop %v1010
  %1012 = vst.msk [vmem:[#allocation3 + $0x2] sm:$0x3] %vm101, %v1011
  %v1013 = vld [vmem:[#allocation2 + $0x4] sm:$0x3]
  %1015 = vset.pattern.permute.xlu0 0
  %1016 = vperm.xlu0 %1015, %v1011
  %v1017 = vpop.permute.xlu0 %1016
  %v1019 = vmul.f32 %v1017, %v971
  %v1020 = vadd.f32 %v1013, %v1019
  %1021 = vset.pattern.permute.xlu0 1
  %1022 = vperm.xlu0 %1021, %v1011
  %v1023 = vpop.permute.xlu0 %1022
  %v1025 = vmul.f32 %v1023, %v976
  %v1026 = vadd.f32 %v1020, %v1025
  %1027 = vset.pattern.permute.xlu0 2
  %1028 = vperm.xlu0 %1027, %v1011
  %v1029 = vpop.permute.xlu0 %1028
  %v1031 = vmul.f32 %v1029, %v981
  %v1032 = vadd.f32 %v1026, %v1031
  %v1033 = vtanh.pop %v1032
  %1034 = vst.msk [vmem:[#allocation3 + $0x4] sm:$0x3] %vm101, %v1033
  %v1035 = vld [vmem:[#allocation2 + $0x6] sm:$0x3]
  %1037 = vset.pattern.permute.xlu0 0
  %1038 = vperm.xlu0 %1037, %v1033
  %v1039 = vpop.permute.xlu0 %1038
  %v1041 = vmul.f32 %v1039, %v971
  %v1042 = vadd.f32 %v1035, %v1041
  %1043 = vset.pattern.permute.xlu0 1
  %1044 = vperm.xlu0 %1043, %v1033
  %v1045 = vpop.permute.xlu0 %1044
  %v1047 = vmul.f32 %v1045, %v976
  %v1048 = vadd.f32 %v1042, %v1047
  %1049 = vset.pattern.permute.xlu0 2
  %1050 = vperm.xlu0 %1049, %v1033
  %v1051 = vpop.permute.xlu0 %1050
  %v1053 = vmul.f32 %v1051, %v981
  %v1054 = vadd.f32 %v1048, %v1053
  %v1055 = vtanh.pop %v1054
  %1056 = vst.msk [vmem:[#allocation3 + $0x6] sm:$0x3] %vm101, %v1055
  %v1057 = vld [vmem:[#allocation2 + $0x8] sm:$0x3]
  %1059 = vset.pattern.permute.xlu0 0
  %1060 = vperm.xlu0 %1059, %v1055
  %v1061 = vpop.permute.xlu0 %1060
  %v1063 = vmul.f32 %v1061, %v971
  %v1064 = vadd.f32 %v1057, %v1063
  %1065 = vset.pattern.permute.xlu0 1
  %1066 = vperm.xlu0 %1065, %v1055
  %v1067 = vpop.permute.xlu0 %1066
  %v1069 = vmul.f32 %v1067, %v976
  %v1070 = vadd.f32 %v1064, %v1069
  %1071 = vset.pattern.permute.xlu0 2
  %1072 = vperm.xlu0 %1071, %v1055
  %v1073 = vpop.permute.xlu0 %1072
  %v1075 = vmul.f32 %v1073, %v981
  %v1076 = vadd.f32 %v1070, %v1075
  %v1077 = vtanh.pop %v1076
  %1078 = vst.msk [vmem:[#allocation3 + $0x8] sm:$0x3] %vm101, %v1077
  %v1079 = vld [vmem:[#allocation2 + $0xa] sm:$0x3]
  %1081 = vset.pattern.permute.xlu0 0
  %1082 = vperm.xlu0 %1081, %v1077
  %v1083 = vpop.permute.xlu0 %1082
  %v1085 = vmul.f32 %v1083, %v971
  %v1086 = vadd.f32 %v1079, %v1085
  %1087 = vset.pattern.permute.xlu0 1
  %1088 = vperm.xlu0 %1087, %v1077
  %v1089 = vpop.permute.xlu0 %1088
  %v1091 = vmul.f32 %v1089, %v976
  %v1092 = vadd.f32 %v1086, %v1091
  %1093 = vset.pattern.permute.xlu0 2
  %1094 = vperm.xlu0 %1093, %v1077
  %v1095 = vpop.permute.xlu0 %1094
  %v1097 = vmul.f32 %v1095, %v981
  %v1098 = vadd.f32 %v1092, %v1097
  %v1099 = vtanh.pop %v1098
  %1100 = vst.msk [vmem:[#allocation3 + $0xa] sm:$0x3] %vm101, %v1099
  %v1101 = vld [vmem:[#allocation2 + $0xc] sm:$0x3]
  %1103 = vset.pattern.permute.xlu0 0
  %1104 = vperm.xlu0 %1103, %v1099
  %v1105 = vpop.permute.xlu0 %1104
  %v1107 = vmul.f32 %v1105, %v971
  %v1108 = vadd.f32 %v1101, %v1107
  %1109 = vset.pattern.permute.xlu0 1
  %1110 = vperm.xlu0 %1109, %v1099
  %v1111 = vpop.permute.xlu0 %1110
  %v1113 = vmul.f32 %v1111, %v976
  %v1114 = vadd.f32 %v1108, %v1113
  %1115 = vset.pattern.permute.xlu0 2
  %1116 = vperm.xlu0 %1115, %v1099
  %v1117 = vpop.permute.xlu0 %1116
  %v1119 = vmul.f32 %v1117, %v981
  %v1120 = vadd.f32 %v1114, %v1119
  %v1121 = vtanh.pop %v1120
  %1122 = vst.msk [vmem:[#allocation3 + $0xc] sm:$0x3] %vm101, %v1121
  %v1123 = vld [vmem:[#allocation2 + $0xe] sm:$0x3]
  %1125 = vset.pattern.permute.xlu0 0
  %1126 = vperm.xlu0 %1125, %v1121
  %v1127 = vpop.permute.xlu0 %1126
  %v1129 = vmul.f32 %v1127, %v971
  %v1130 = vadd.f32 %v1123, %v1129
  %1131 = vset.pattern.permute.xlu0 1
  %1132 = vperm.xlu0 %1131, %v1121
  %v1133 = vpop.permute.xlu0 %1132
  %v1135 = vmul.f32 %v1133, %v976
  %v1136 = vadd.f32 %v1130, %v1135
  %1137 = vset.pattern.permute.xlu0 2
  %1138 = vperm.xlu0 %1137, %v1121
  %v1139 = vpop.permute.xlu0 %1138
  %v1141 = vmul.f32 %v1139, %v981
  %v1142 = vadd.f32 %v1136, %v1141
  %v1143 = vtanh.pop %v1142
  %1144 = vst.msk [vmem:[#allocation3 + $0xe] sm:$0x3] %vm101, %v1143
  %v1145 = vld [vmem:[#allocation3] sm:$0xff]
  %v1146 = vld [vmem:[#allocation3 + $0x8] sm:$0xff]
  %v1147 = vpack.c.bf16 %v1146, %v1145
  %v1148 = vpack.c.bf16 %v907, %v907
  %v1149 = vlaneseq
  %v1150 = vshrl.u32 %v1149, 7
  %v1151 = vsub.s32 0, %v1150
  %v1152 = vrot.slane %v909, %v1151
  %v1154 = vsel %vm75, %v1147, 0
  %v1157 = vand.u32 %v1148, %v270
  %1159 = vmatprep.subr.bf16.mxu0 0
  %1160 = vmatpush1.bf16.msra.mxu0 0
  %1161 = vmatprep.subr.bf16.mxu0 0
  %1162 = vmatpush1.bf16.msra.mxu0 0
  %1163 = vmatprep.subr.bf16.mxu0 0
  %1164 = vmatpush1.bf16.msra.mxu0 0
  %1165 = vmatprep.subr.bf16.mxu0 0
  %1166 = vmatpush1.bf16.msra.mxu0 0
  %1167 = vmatprep.subr.bf16.mxu0 0
  %1168 = vmatpush1.bf16.msra.mxu0 0
  %1169 = vmatprep.subr.bf16.mxu0 0
  %1170 = vmatpush1.bf16.msra.mxu0 0
  %1171 = vmatprep.subr.bf16.mxu0 0
  %1172 = vmatpush1.bf16.msra.mxu0 0
  %1173 = vmatprep.subr.bf16.mxu0 0
  %1174 = vmatpush1.bf16.msra.mxu0 %v1157
  %1175 = vmatprep.subr.bf16.mxu0 0
  %1176 = vmatpush2.bf16.msra.mxu0 0
  %1177 = vmatprep.subr.bf16.mxu0 0
  %1178 = vmatpush2.bf16.msra.mxu0 0
  %1179 = vmatprep.subr.bf16.mxu0 0
  %1180 = vmatpush2.bf16.msra.mxu0 0
  %1181 = vmatprep.subr.bf16.mxu0 0
  %1182 = vmatpush2.bf16.msra.mxu0 0
  %1183 = vmatprep.subr.bf16.mxu0 0
  %1184 = vmatpush2.bf16.msra.mxu0 0
  %1185 = vmatprep.subr.bf16.mxu0 0
  %1186 = vmatpush2.bf16.msra.mxu0 0
  %1187 = vmatprep.subr.bf16.mxu0 0
  %1188 = vmatpush2.bf16.msra.mxu0 0
  %1189 = vmatprep.subr.bf16.mxu0 0
  %1190 = vmatpush2.bf16.msra.mxu0 0
  %1191 = vmatprep.mubr.bf16.mxu0 0
  %1192 = vmatmul.mubr.bf16.gmra.mxu0 %v1154
  %v1193 = vpop.f32.mrf.mxu0
  %v1194 = vadd.f32 %v1152, %v1193
  %v1195 = vpop.f32.mrf.mxu0
  %v1196 = vpop.f32.mrf.mxu0
  %v1197 = vadd.f32 %v1152, %v1196
  %v1198 = vpop.f32.mrf.mxu0
  %1199 = vdwg.mxu0
  %s1200 = scalar_lea.vmem %s1, 64
  %v1201 = vld [vmem:[%s1200] sm:$0x3]
  %v1202 = vld [vmem:[%s1200 + $0x5] sm:$0x7]
  %v1203 = vld [vmem:[%s1200 + $0x8] sm:$0x1]
  %v1204 = vld [vmem:[%s1200 + $0x9] sm:$0x1]
  %v1205 = vmax.f32 %v1194, 0.0
  %v1206 = vmax.f32 %v1197, 0.0
  %v1207 = vpack.c.bf16 %v1206, %v1205
  %v1208 = vpack.c.bf16 %v1201, %v1201
  %v1209 = vlaneseq
  %v1210 = vshrl.u32 %v1209, 7
  %v1211 = vsub.s32 0, %v1210
  %v1212 = vrot.slane %v1203, %v1211
  %v1214 = vsel %vm26, %v1207, 0
  %v1217 = vsel %vm30, %v1208, 0
  %1219 = vmatprep.subr.bf16.mxu0 0
  %1220 = vmatpush1.bf16.msra.mxu0 0
  %1221 = vmatprep.subr.bf16.mxu0 0
  %1222 = vmatpush1.bf16.msra.mxu0 0
  %1223 = vmatprep.subr.bf16.mxu0 0
  %1224 = vmatpush1.bf16.msra.mxu0 0
  %1225 = vmatprep.subr.bf16.mxu0 0
  %1226 = vmatpush1.bf16.msra.mxu0 0
  %1227 = vmatprep.subr.bf16.mxu0 0
  %1228 = vmatpush1.bf16.msra.mxu0 0
  %1229 = vmatprep.subr.bf16.mxu0 0
  %1230 = vmatpush1.bf16.msra.mxu0 0
  %1231 = vmatprep.subr.bf16.mxu0 0
  %1232 = vmatpush1.bf16.msra.mxu0 0
  %1233 = vmatprep.subr.bf16.mxu0 0
  %1234 = vmatpush1.bf16.msra.mxu0 %v1217
  %1235 = vmatprep.subr.bf16.mxu0 0
  %1236 = vmatpush2.bf16.msra.mxu0 0
  %1237 = vmatprep.subr.bf16.mxu0 0
  %1238 = vmatpush2.bf16.msra.mxu0 0
  %1239 = vmatprep.subr.bf16.mxu0 0
  %1240 = vmatpush2.bf16.msra.mxu0 0
  %1241 = vmatprep.subr.bf16.mxu0 0
  %1242 = vmatpush2.bf16.msra.mxu0 0
  %1243 = vmatprep.subr.bf16.mxu0 0
  %1244 = vmatpush2.bf16.msra.mxu0 0
  %1245 = vmatprep.subr.bf16.mxu0 0
  %1246 = vmatpush2.bf16.msra.mxu0 0
  %1247 = vmatprep.subr.bf16.mxu0 0
  %1248 = vmatpush2.bf16.msra.mxu0 0
  %1249 = vmatprep.subr.bf16.mxu0 0
  %1250 = vmatpush2.bf16.msra.mxu0 0
  %1251 = vmatprep.mubr.bf16.mxu0 0
  %1252 = vmatmul.mubr.bf16.gmra.mxu0 %v1214
  %v1253 = vpop.f32.mrf.mxu0
  %v1254 = vadd.f32 %v1212, %v1253
  %v1255 = vpop.f32.mrf.mxu0
  %v1256 = vpop.f32.mrf.mxu0
  %v1257 = vadd.f32 %v1212, %v1256
  %v1258 = vpop.f32.mrf.mxu0
  %1259 = vdwg.mxu0
  %1260 = vst.msk [vmem:[#allocation2] sm:$0xff] %vm75, %v1254
  %1261 = vst.msk [vmem:[#allocation2 + $0x8] sm:$0xff] %vm75, %v1257
  %v1262 = vld [vmem:[%s1200 + $0x2] sm:$0x1]
  %v1263 = vlaneseq
  %v1264 = vshrl.u32 %v1263, 7
  %v1265 = vsub.s32 0, %v1264
  %v1266 = vrot.slane %v1262, %v1265
  %v1267 = vld [vmem:[%s1200 + $0x3] sm:$0x1]
  %v1268 = vlaneseq
  %v1269 = vshrl.u32 %v1268, 7
  %v1270 = vsub.s32 0, %v1269
  %v1271 = vrot.slane %v1267, %v1270
  %v1272 = vld [vmem:[%s1200 + $0x4] sm:$0x1]
  %v1273 = vlaneseq
  %v1274 = vshrl.u32 %v1273, 7
  %v1275 = vsub.s32 0, %v1274
  %v1276 = vrot.slane %v1272, %v1275
  %v1277 = vld [vmem:[#allocation2] sm:$0x3]
  %v1278 = vmul.f32 %v1266, 0.0
  %v1279 = vadd.f32 %v1277, %v1278
  %v1280 = vmul.f32 %v1271, 0.0
  %v1281 = vadd.f32 %v1279, %v1280
  %v1282 = vmul.f32 %v1276, 0.0
  %v1283 = vadd.f32 %v1281, %v1282
  %v1284 = vtanh.pop %v1283
  %1285 = vst.msk [vmem:[#allocation3] sm:$0x3] %vm101, %v1284
  %v1286 = vld [vmem:[#allocation2 + $0x2] sm:$0x3]
  %1288 = vset.pattern.permute.xlu0 0
  %1289 = vperm.xlu0 %1288, %v1284
  %v1290 = vpop.permute.xlu0 %1289
  %v1292 = vmul.f32 %v1290, %v1266
  %v1293 = vadd.f32 %v1286, %v1292
  %1294 = vset.pattern.permute.xlu0 1
  %1295 = vperm.xlu0 %1294, %v1284
  %v1296 = vpop.permute.xlu0 %1295
  %v1298 = vmul.f32 %v1296, %v1271
  %v1299 = vadd.f32 %v1293, %v1298
  %1300 = vset.pattern.permute.xlu0 2
  %1301 = vperm.xlu0 %1300, %v1284
  %v1302 = vpop.permute.xlu0 %1301
  %v1304 = vmul.f32 %v1302, %v1276
  %v1305 = vadd.f32 %v1299, %v1304
  %v1306 = vtanh.pop %v1305
  %1307 = vst.msk [vmem:[#allocation3 + $0x2] sm:$0x3] %vm101, %v1306
  %v1308 = vld [vmem:[#allocation2 + $0x4] sm:$0x3]
  %1310 = vset.pattern.permute.xlu0 0
  %1311 = vperm.xlu0 %1310, %v1306
  %v1312 = vpop.permute.xlu0 %1311
  %v1314 = vmul.f32 %v1312, %v1266
  %v1315 = vadd.f32 %v1308, %v1314
  %1316 = vset.pattern.permute.xlu0 1
  %1317 = vperm.xlu0 %1316, %v1306
  %v1318 = vpop.permute.xlu0 %1317
  %v1320 = vmul.f32 %v1318, %v1271
  %v1321 = vadd.f32 %v1315, %v1320
  %1322 = vset.pattern.permute.xlu0 2
  %1323 = vperm.xlu0 %1322, %v1306
  %v1324 = vpop.permute.xlu0 %1323
  %v1326 = vmul.f32 %v1324, %v1276
  %v1327 = vadd.f32 %v1321, %v1326
  %v1328 = vtanh.pop %v1327
  %1329 = vst.msk [vmem:[#allocation3 + $0x4] sm:$0x3] %vm101, %v1328
  %v1330 = vld [vmem:[#allocation2 + $0x6] sm:$0x3]
  %1332 = vset.pattern.permute.xlu0 0
  %1333 = vperm.xlu0 %1332, %v1328
  %v1334 = vpop.permute.xlu0 %1333
  %v1336 = vmul.f32 %v1334, %v1266
  %v1337 = vadd.f32 %v1330, %v1336
  %1338 = vset.pattern.permute.xlu0 1
  %1339 = vperm.xlu0 %1338, %v1328
  %v1340 = vpop.permute.xlu0 %1339
  %v1342 = vmul.f32 %v1340, %v1271
  %v1343 = vadd.f32 %v1337, %v1342
  %1344 = vset.pattern.permute.xlu0 2
  %1345 = vperm.xlu0 %1344, %v1328
  %v1346 = vpop.permute.xlu0 %1345
  %v1348 = vmul.f32 %v1346, %v1276
  %v1349 = vadd.f32 %v1343, %v1348
  %v1350 = vtanh.pop %v1349
  %1351 = vst.msk [vmem:[#allocation3 + $0x6] sm:$0x3] %vm101, %v1350
  %v1352 = vld [vmem:[#allocation2 + $0x8] sm:$0x3]
  %1354 = vset.pattern.permute.xlu0 0
  %1355 = vperm.xlu0 %1354, %v1350
  %v1356 = vpop.permute.xlu0 %1355
  %v1358 = vmul.f32 %v1356, %v1266
  %v1359 = vadd.f32 %v1352, %v1358
  %1360 = vset.pattern.permute.xlu0 1
  %1361 = vperm.xlu0 %1360, %v1350
  %v1362 = vpop.permute.xlu0 %1361
  %v1364 = vmul.f32 %v1362, %v1271
  %v1365 = vadd.f32 %v1359, %v1364
  %1366 = vset.pattern.permute.xlu0 2
  %1367 = vperm.xlu0 %1366, %v1350
  %v1368 = vpop.permute.xlu0 %1367
  %v1370 = vmul.f32 %v1368, %v1276
  %v1371 = vadd.f32 %v1365, %v1370
  %v1372 = vtanh.pop %v1371
  %1373 = vst.msk [vmem:[#allocation3 + $0x8] sm:$0x3] %vm101, %v1372
  %v1374 = vld [vmem:[#allocation2 + $0xa] sm:$0x3]
  %1376 = vset.pattern.permute.xlu0 0
  %1377 = vperm.xlu0 %1376, %v1372
  %v1378 = vpop.permute.xlu0 %1377
  %v1380 = vmul.f32 %v1378, %v1266
  %v1381 = vadd.f32 %v1374, %v1380
  %1382 = vset.pattern.permute.xlu0 1
  %1383 = vperm.xlu0 %1382, %v1372
  %v1384 = vpop.permute.xlu0 %1383
  %v1386 = vmul.f32 %v1384, %v1271
  %v1387 = vadd.f32 %v1381, %v1386
  %1388 = vset.pattern.permute.xlu0 2
  %1389 = vperm.xlu0 %1388, %v1372
  %v1390 = vpop.permute.xlu0 %1389
  %v1392 = vmul.f32 %v1390, %v1276
  %v1393 = vadd.f32 %v1387, %v1392
  %v1394 = vtanh.pop %v1393
  %1395 = vst.msk [vmem:[#allocation3 + $0xa] sm:$0x3] %vm101, %v1394
  %v1396 = vld [vmem:[#allocation2 + $0xc] sm:$0x3]
  %1398 = vset.pattern.permute.xlu0 0
  %1399 = vperm.xlu0 %1398, %v1394
  %v1400 = vpop.permute.xlu0 %1399
  %v1402 = vmul.f32 %v1400, %v1266
  %v1403 = vadd.f32 %v1396, %v1402
  %1404 = vset.pattern.permute.xlu0 1
  %1405 = vperm.xlu0 %1404, %v1394
  %v1406 = vpop.permute.xlu0 %1405
  %v1408 = vmul.f32 %v1406, %v1271
  %v1409 = vadd.f32 %v1403, %v1408
  %1410 = vset.pattern.permute.xlu0 2
  %1411 = vperm.xlu0 %1410, %v1394
  %v1412 = vpop.permute.xlu0 %1411
  %v1414 = vmul.f32 %v1412, %v1276
  %v1415 = vadd.f32 %v1409, %v1414
  %v1416 = vtanh.pop %v1415
  %1417 = vst.msk [vmem:[#allocation3 + $0xc] sm:$0x3] %vm101, %v1416
  %v1418 = vld [vmem:[#allocation2 + $0xe] sm:$0x3]
  %1420 = vset.pattern.permute.xlu0 0
  %1421 = vperm.xlu0 %1420, %v1416
  %v1422 = vpop.permute.xlu0 %1421
  %v1424 = vmul.f32 %v1422, %v1266
  %v1425 = vadd.f32 %v1418, %v1424
  %1426 = vset.pattern.permute.xlu0 1
  %1427 = vperm.xlu0 %1426, %v1416
  %v1428 = vpop.permute.xlu0 %1427
  %v1430 = vmul.f32 %v1428, %v1271
  %v1431 = vadd.f32 %v1425, %v1430
  %1432 = vset.pattern.permute.xlu0 2
  %1433 = vperm.xlu0 %1432, %v1416
  %v1434 = vpop.permute.xlu0 %1433
  %v1436 = vmul.f32 %v1434, %v1276
  %v1437 = vadd.f32 %v1431, %v1436
  %v1438 = vtanh.pop %v1437
  %1439 = vst.msk [vmem:[#allocation3 + $0xe] sm:$0x3] %vm101, %v1438
  %v1440 = vld [vmem:[#allocation3] sm:$0xff]
  %v1441 = vld [vmem:[#allocation3 + $0x8] sm:$0xff]
  %v1442 = vpack.c.bf16 %v1441, %v1440
  %v1443 = vpack.c.bf16 %v1202, %v1202
  %v1444 = vlaneseq
  %v1445 = vshrl.u32 %v1444, 7
  %v1446 = vsub.s32 0, %v1445
  %v1447 = vrot.slane %v1204, %v1446
  %v1449 = vsel %vm75, %v1442, 0
  %v1452 = vand.u32 %v1443, %v270
  %1454 = vmatprep.subr.bf16.mxu0 0
  %1455 = vmatpush1.bf16.msra.mxu0 0
  %1456 = vmatprep.subr.bf16.mxu0 0
  %1457 = vmatpush1.bf16.msra.mxu0 0
  %1458 = vmatprep.subr.bf16.mxu0 0
  %1459 = vmatpush1.bf16.msra.mxu0 0
  %1460 = vmatprep.subr.bf16.mxu0 0
  %1461 = vmatpush1.bf16.msra.mxu0 0
  %1462 = vmatprep.subr.bf16.mxu0 0
  %1463 = vmatpush1.bf16.msra.mxu0 0
  %1464 = vmatprep.subr.bf16.mxu0 0
  %1465 = vmatpush1.bf16.msra.mxu0 0
  %1466 = vmatprep.subr.bf16.mxu0 0
  %1467 = vmatpush1.bf16.msra.mxu0 0
  %1468 = vmatprep.subr.bf16.mxu0 0
  %1469 = vmatpush1.bf16.msra.mxu0 %v1452
  %1470 = vmatprep.subr.bf16.mxu0 0
  %1471 = vmatpush2.bf16.msra.mxu0 0
  %1472 = vmatprep.subr.bf16.mxu0 0
  %1473 = vmatpush2.bf16.msra.mxu0 0
  %1474 = vmatprep.subr.bf16.mxu0 0
  %1475 = vmatpush2.bf16.msra.mxu0 0
  %1476 = vmatprep.subr.bf16.mxu0 0
  %1477 = vmatpush2.bf16.msra.mxu0 0
  %1478 = vmatprep.subr.bf16.mxu0 0
  %1479 = vmatpush2.bf16.msra.mxu0 0
  %1480 = vmatprep.subr.bf16.mxu0 0
  %1481 = vmatpush2.bf16.msra.mxu0 0
  %1482 = vmatprep.subr.bf16.mxu0 0
  %1483 = vmatpush2.bf16.msra.mxu0 0
  %1484 = vmatprep.subr.bf16.mxu0 0
  %1485 = vmatpush2.bf16.msra.mxu0 0
  %1486 = vmatprep.mubr.bf16.mxu0 0
  %1487 = vmatmul.mubr.bf16.gmra.mxu0 %v1449
  %v1488 = vpop.f32.mrf.mxu0
  %v1489 = vadd.f32 %v1447, %v1488
  %v1490 = vpop.f32.mrf.mxu0
  %v1491 = vpop.f32.mrf.mxu0
  %v1492 = vadd.f32 %v1447, %v1491
  %v1493 = vpop.f32.mrf.mxu0
  %1494 = vdwg.mxu0
  %1495 = vst.msk [vmem:[%s2] sm:$0xff] %vm26, %v1489
  %1496 = vst.msk [vmem:[%s2 + $0x8] sm:$0xff] %vm26, %v1492
  // Predicated region
  $region10: #{decoder_feedforward_network.1} parent=0 // pred_check
    _
  $region11: #{decoder_feedforward_network.1} parent=0 // pred_check_branch
    %1498 = sbr.rel (0) target = $region13
  $region12: #{decoder_feedforward_network.1} parent=0 // pred_region
    _
  $region13: #{decoder_feedforward_network.1} parent=0 // pred_fallthru
    _
  // Predicated region
  $region14: #{decoder_feedforward_network.1} parent=0 // pred_check
    _
  $region15: #{decoder_feedforward_network.1} parent=0 // pred_check_branch
    %1500 = sbr.rel (0) target = $region17
  $region16: #{decoder_feedforward_network.1} parent=0 // pred_region
    _
  $region17: #{decoder_feedforward_network.1} parent=0 // pred_fallthru
    _

</llo_original>
